<compile_context>
chip_gen: v7x
topology: tpu7x:2x2x1
jax: 0.10.0
libtpu: 0.0.40
codegen_flags: <defaults>
</compile_context>

<pallas_src>
import math
from functools import partial

import jax
import jax.numpy as jnp
from jax.experimental import pallas as pl
from jax.experimental.pallas import tpu as pltpu


def _round_up(x, m):
    return ((x + m - 1) // m) * m


def _tpu_defaults():
    """(vmem_budget_bytes, lane_multiple) for the local TPU generation."""
    kind = ""
    try:
        kind = jax.devices()[0].device_kind.lower()
    except Exception:
        pass
    if "v7" in kind:
        return 50 * 1024 * 1024, 256     # 64 MiB physical VMEM per TensorCore
    if "v6" in kind or "trillium" in kind:
        return 100 * 1024 * 1024, 256    # 128 MiB VMEM, 2x256x256 MXU
    if "v5" in kind:
        return 100 * 1024 * 1024, 128    # v5e/v5p: 128 MiB VMEM
    return 48 * 1024 * 1024, 128         # unknown: conservative


def _fit_row_tile(tm_req, M, Hp, Dp, dk, x_bytes, w_bytes, out_bytes, budget):
    """Pick a row tile that fits the VMEM budget and keeps >= 2 grid steps."""
    Mp = _round_up(M, 8)
    tm = _round_up(max(8, tm_req), 8)
    tm = min(tm, Mp)
    # >= 2 "parallel" grid steps so both v7x TensorCores get work (when possible).
    if Mp >= 16:
        tm = min(tm, _round_up(pl.cdiv(Mp, 2), 8))
    # Shrink tm until the footprint fits the budget.
    resident = 2 * Hp * Dp * w_bytes + (Hp + Dp) * 4       # W1+W2 (1 buf) + biases
    per_row = (2 * Hp * x_bytes       # x row-tile, double-buffered
               + 2 * Hp * out_bytes   # out row-tile, double-buffered
               + Hp * 4               # f32 accumulator scratch
               + 3 * dk * 4)          # live per-chunk intermediates (h, gelu, slack)
    avail = budget - resident
    if avail > 0:
        tm_fit = max(8, (avail // per_row) // 8 * 8)
        tm = min(tm, tm_fit)
    else:
        # TODO(synk): weights alone exceed the budget (e.g. ViT-H on v7x) --
        # stream D-chunked weights from HBM instead of keeping them resident.
        tm = 8
    return tm, Mp


def _mlp_kernel(x_ref, w1_ref, b1_ref, w2_ref, b2_ref, o_ref, acc_ref,
                *, chunks, compute_dtype, approximate_gelu):
    """One grid step: a [tm, Hp] row-tile through fc1 -> GELU -> fc2, fused
    over static D-chunks into an f32 VMEM accumulator."""
    x = x_ref[...].astype(compute_dtype)            # per-tile cast (MXU input)
    acc_ref[...] = jnp.zeros_like(acc_ref)
    for lo, sz in chunks:                           # static, unrolled
        # fc1 slice on the MXU, f32 accumulation: [tm, Hp] @ [Hp, sz] + [1, sz]
        h = jnp.dot(x, w1_ref[:, lo:lo + sz],
                    preferred_element_type=jnp.float32) + b1_ref[:, lo:lo + sz]
        if approximate_gelu:
            g = jax.nn.gelu(h, approximate=True)    # tanh -> idle EUP slot
        else:
            # exact (erf) GELU in f32: matches torch.nn.functional.gelu default
            g = 0.5 * h * (1.0 + jax.lax.erf(h * (1.0 / math.sqrt(2.0))))
        # dropout -> identity (eval mode)
        # TODO(synk): training-mode dropout (pltpu.prng_seed / prng_random_bits) omitted.
        # fc2 slice on the MXU, accumulated: [tm, sz] @ [sz, Hp]
        acc_ref[...] += jnp.dot(g.astype(compute_dtype), w2_ref[lo:lo + sz, :],
                                preferred_element_type=jnp.float32)
    o_ref[...] = (acc_ref[...] + b2_ref[...]).astype(o_ref.dtype)


def mlp_forward(x, w1, b1, w2, b2, *, tm=512, d_chunk=512,
                compute_dtype=jnp.bfloat16, out_dtype=None,
                approximate_gelu=False):
    """ViT MLP forward: fc2(gelu(fc1(x))), dropout = identity (eval mode).

    x: [B, S, H]; w1: [H, D] (= fc1.weight.T); b1: [D];
    w2: [D, H] (= fc2.weight.T); b2: [H].
    """
    B, S, H = x.shape
    D = w1.shape[1]
    M = B * S
    out_dtype = x.dtype if out_dtype is None else out_dtype

    budget, lane = _tpu_defaults()
    Hp = _round_up(H, lane)                         # lane/MXU-dense padding
    Dp = _round_up(D, lane)

    # Static D-chunk boundaries (last chunk may be smaller; all multiples of 128).
    dk = min(_round_up(max(128, d_chunk), 128), Dp)
    chunks, lo = [], 0
    while lo < Dp:
        sz = min(dk, Dp - lo)
        chunks.append((lo, sz))
        lo += sz
    chunks = tuple(chunks)

    x_bytes = jnp.dtype(x.dtype).itemsize
    w_bytes = jnp.dtype(compute_dtype).itemsize
    o_bytes = jnp.dtype(out_dtype).itemsize
    tm, Mp = _fit_row_tile(tm, M, Hp, Dp, dk, x_bytes, w_bytes, o_bytes, budget)

    # x stays at native dtype; pad only when needed so the common aligned case
    # (H multiple of `lane`, M multiple of 8) is a pure pass-through.
    x2 = x.reshape(M, H)
    if Mp != M or Hp != H:
        x2 = jnp.pad(x2, ((0, Mp - M), (0, Hp - H)))
    w1p = jnp.pad(w1.astype(compute_dtype), ((0, Hp - H), (0, Dp - D)))
    w2p = jnp.pad(w2.astype(compute_dtype), ((0, Dp - D), (0, Hp - H)))
    b1p = jnp.pad(b1.astype(jnp.float32), ((0, Dp - D),)).reshape(1, Dp)
    b2p = jnp.pad(b2.astype(jnp.float32), ((0, Hp - H),)).reshape(1, Hp)

    cost = pl.CostEstimate(
        flops=4 * Mp * Hp * Dp,                     # two matmuls
        transcendentals=Mp * Dp,                    # one GELU per fc1 output
        bytes_accessed=(x2.size * x_bytes + (w1p.size + w2p.size) * w_bytes
                        + (b1p.size + b2p.size) * 4 + Mp * Hp * o_bytes),
    )

    kernel = partial(_mlp_kernel, chunks=chunks, compute_dtype=compute_dtype,
                     approximate_gelu=approximate_gelu)

    def build(single_buffer_weights):
        def resident(shape):
            # Constant index_map -> fetched once; single-buffer to save VMEM.
            if single_buffer_weights:
                return pl.BlockSpec(shape, lambda i: (0, 0),
                                    pipeline_mode=pl.Buffered(buffer_count=1))
            return pl.BlockSpec(shape, lambda i: (0, 0))

        return pl.pallas_call(
            kernel,
            out_shape=jax.ShapeDtypeStruct((Mp, Hp), out_dtype),
            grid_spec=pltpu.PrefetchScalarGridSpec(
                num_scalar_prefetch=0,
                grid=(pl.cdiv(Mp, tm),),
                in_specs=[
                    pl.BlockSpec((tm, Hp), lambda i: (i, 0)),   # x row-tile (pipelined)
                    resident((Hp, Dp)),                         # W1
                    resident((1, Dp)),                          # b1
                    resident((Dp, Hp)),                         # W2
                    resident((1, Hp)),                          # b2
                ],
                out_specs=pl.BlockSpec((tm, Hp), lambda i: (i, 0)),
                scratch_shapes=[pltpu.VMEM((tm, Hp), jnp.float32)],  # f32 accumulator
            ),
            compiler_params=pltpu.CompilerParams(
                dimension_semantics=("parallel",),
                vmem_limit_bytes=budget,
            ),
            cost_estimate=cost,
        )

    args = (x2, w1p, b1p, w2p, b2p)
    try:
        out = jax.block_until_ready(build(True)(*args))
    except Exception:
        # pl.Buffered(1) on resident weights not supported by this jax version:
        # fall back to default (double-buffered) weight specs.
        out = build(False)(*args)

    return out[:M, :H].reshape(B, S, H)


def xavier_uniform(key, fan_in, fan_out, shape, dtype=jnp.float32):
    limit = math.sqrt(6.0 / (fan_in + fan_out))
    return jax.random.uniform(key, shape, dtype, minval=-limit, maxval=limit)


if __name__ == "__main__":
    # config: hidden_size=32, mlp_dim=256, dropout_rate=0.0 (eval mode)
    B, S, H, D = 2, 8, 32, 256

    key = jax.random.PRNGKey(0)
    kx, kw1, kb1, kw2, kb2 = jax.random.split(key, 5)

    x = jax.random.normal(kx, (B, S, H), dtype=jnp.float32)
    # fc1.weight in torch is [D, H]; we store the transpose [H, D].
    w1 = xavier_uniform(kw1, H, D, (H, D))
    b1 = 1e-6 * jax.random.normal(kb1, (D,), dtype=jnp.float32)
    # fc2.weight in torch is [H, D]; we store the transpose [D, H].
    w2 = xavier_uniform(kw2, D, H, (D, H))
    b2 = 1e-6 * jax.random.normal(kb2, (H,), dtype=jnp.float32)

    # plain-JAX reference (f32, highest precision, exact erf GELU)
    mm = lambda a, b: jnp.dot(a, b, precision=jax.lax.Precision.HIGHEST)
    h_ref = mm(x.reshape(-1, H), w1) + b1
    h_ref = 0.5 * h_ref * (1.0 + jax.lax.erf(h_ref / math.sqrt(2.0)))
    y_ref = (mm(h_ref, w2) + b2).reshape(B, S, H)

    # f32 path with small row tiles + 128-wide D-chunks so both the multi-step
    # "parallel" grid and the multi-chunk fused loop are exercised; tight tol.
    y_f32 = mlp_forward(x, w1, b1, w2, b2, tm=8, d_chunk=128,
                        compute_dtype=jnp.float32)
    jax.block_until_ready(y_f32)
    assert jnp.allclose(y_f32, y_ref, atol=1e-5, rtol=1e-5), "f32 path mismatch"

    # bf16 MXU path (production default): bf16 inputs, f32 accumulation.
    y_bf16 = mlp_forward(x, w1, b1, w2, b2, tm=8, d_chunk=128,
                         compute_dtype=jnp.bfloat16)
    jax.block_until_ready(y_bf16)
    assert jnp.allclose(y_bf16, y_ref, atol=5e-2, rtol=5e-2), "bf16 path mismatch"

    # default tile/chunk sizes + tanh-approx GELU option (EUP slot).
    y_def = mlp_forward(x, w1, b1, w2, b2, approximate_gelu=True)
    jax.block_until_ready(y_def)
    assert jnp.allclose(y_def, y_ref, atol=5e-2, rtol=5e-2), "default path mismatch"

    print("KERNEL_OK")
</pallas_src>

<mosaic_0001>
module attributes {stable_mosaic.version = 11 : i64} {
  func.func @_mlp_kernel(%arg0: i32, %arg1: memref<8x128xf32, #tpu.memory_space<vmem>>, %arg2: memref<128x256xf32, #tpu.memory_space<vmem>>, %arg3: memref<1x256xf32, #tpu.memory_space<vmem>>, %arg4: memref<256x128xf32, #tpu.memory_space<vmem>>, %arg5: memref<1x128xf32, #tpu.memory_space<vmem>>, %arg6: memref<8x128xf32, #tpu.memory_space<vmem>>, %arg7: memref<8x128xf32, #tpu.memory_space<vmem>>) attributes {dimension_semantics = [#tpu.dimension_semantics<parallel>], iteration_bounds = array<i64: 2>, scalar_prefetch = 0 : i64, scratch_operands = 1 : i64, tpu.core_type = #tpu.core_type<tc>, window_params = [{transform_indices = @transform_0, window_bounds = array<i64: 8, 128>}, {pipeline_mode = #tpu.pipeline_mode<synchronous>, transform_indices = @transform_1, window_bounds = array<i64: 128, 256>}, {pipeline_mode = #tpu.pipeline_mode<synchronous>, transform_indices = @transform_2, window_bounds = array<i64: 1, 256>}, {pipeline_mode = #tpu.pipeline_mode<synchronous>, transform_indices = @transform_3, window_bounds = array<i64: 256, 128>}, {pipeline_mode = #tpu.pipeline_mode<synchronous>, transform_indices = @transform_4, window_bounds = array<i64: 1, 128>}, {transform_indices = @transform_5, window_bounds = array<i64: 8, 128>}]} {
    %c0 = arith.constant 0 : index
    %c0_0 = arith.constant 0 : index
    %0 = vector.load %arg1[%c0, %c0_0] : memref<8x128xf32, #tpu.memory_space<vmem>>, vector<8x128xf32>
    %cst = arith.constant 0.000000e+00 : f32
    %1 = vector.broadcast %cst : f32 to vector<8x128xf32>
    %c0_1 = arith.constant 0 : index
    %c0_2 = arith.constant 0 : index
    %2 = vector.load %arg7[%c0_1, %c0_2] : memref<8x128xf32, #tpu.memory_space<vmem>>, vector<8x128xf32>
    tpu.vector_store %arg7[%c0_1, %c0_2], %1 {strides = array<i32>} : memref<8x128xf32, #tpu.memory_space<vmem>>, vector<8x128xf32>,
    %c0_3 = arith.constant 0 : index
    %c0_4 = arith.constant 0 : index
    %3 = vector.load %arg2[%c0_3, %c0_4] : memref<128x256xf32, #tpu.memory_space<vmem>>, vector<128x128xf32>
    %cst_5 = arith.constant dense<0.000000e+00> : vector<8x128xf32>
    %4 = tpu.matmul %0, %3, %cst_5 {dimension_numbers = #tpu.dot_dimension_numbers<[1], [0], [0], [1], [0, 0, 1, 1], [], []>} : vector<8x128xf32>, vector<128x128xf32>, vector<8x128xf32> -> vector<8x128xf32>
    %c0_6 = arith.constant 0 : index
    %c0_7 = arith.constant 0 : index
    %5 = vector.load %arg3[%c0_6, %c0_7] : memref<1x256xf32, #tpu.memory_space<vmem>>, vector<1x128xf32>
    %6 = vector.broadcast %5 : vector<1x128xf32> to vector<8x128xf32>
    %7 = arith.addf %4, %6 : vector<8x128xf32>
    %cst_8 = arith.constant 5.000000e-01 : f32
    %8 = vector.broadcast %cst_8 : f32 to vector<8x128xf32>
    %9 = arith.mulf %8, %7 : vector<8x128xf32>
    %cst_9 = arith.constant 0.707106769 : f32
    %10 = vector.broadcast %cst_9 : f32 to vector<8x128xf32>
    %11 = arith.mulf %7, %10 : vector<8x128xf32>
    %12 = math.erf %11 : vector<8x128xf32>
    %cst_10 = arith.constant 1.000000e+00 : f32
    %13 = vector.broadcast %cst_10 : f32 to vector<8x128xf32>
    %14 = arith.addf %13, %12 : vector<8x128xf32>
    %15 = arith.mulf %9, %14 : vector<8x128xf32>
    %c0_11 = arith.constant 0 : index
    %c0_12 = arith.constant 0 : index
    %16 = vector.load %arg7[%c0_11, %c0_12] : memref<8x128xf32, #tpu.memory_space<vmem>>, vector<8x128xf32>
    %c0_13 = arith.constant 0 : index
    %c0_14 = arith.constant 0 : index
    %17 = vector.load %arg4[%c0_13, %c0_14] : memref<256x128xf32, #tpu.memory_space<vmem>>, vector<128x128xf32>
    %cst_15 = arith.constant dense<0.000000e+00> : vector<8x128xf32>
    %18 = tpu.matmul %15, %17, %cst_15 {dimension_numbers = #tpu.dot_dimension_numbers<[1], [0], [0], [1], [0, 0, 1, 1], [], []>} : vector<8x128xf32>, vector<128x128xf32>, vector<8x128xf32> -> vector<8x128xf32>
    %19 = arith.addf %16, %18 : vector<8x128xf32>
    %c0_16 = arith.constant 0 : index
    %c0_17 = arith.constant 0 : index
    %20 = vector.load %arg7[%c0_16, %c0_17] : memref<8x128xf32, #tpu.memory_space<vmem>>, vector<8x128xf32>
    tpu.vector_store %arg7[%c0_16, %c0_17], %19 {strides = array<i32>} : memref<8x128xf32, #tpu.memory_space<vmem>>, vector<8x128xf32>,
    %c0_18 = arith.constant 0 : index
    %c128 = arith.constant 128 : index
    %21 = vector.load %arg2[%c0_18, %c128] : memref<128x256xf32, #tpu.memory_space<vmem>>, vector<128x128xf32>
    %cst_19 = arith.constant dense<0.000000e+00> : vector<8x128xf32>
    %22 = tpu.matmul %0, %21, %cst_19 {dimension_numbers = #tpu.dot_dimension_numbers<[1], [0], [0], [1], [0, 0, 1, 1], [], []>} : vector<8x128xf32>, vector<128x128xf32>, vector<8x128xf32> -> vector<8x128xf32>
    %c0_20 = arith.constant 0 : index
    %c128_21 = arith.constant 128 : index
    %23 = vector.load %arg3[%c0_20, %c128_21] : memref<1x256xf32, #tpu.memory_space<vmem>>, vector<1x128xf32>
    %24 = vector.broadcast %23 : vector<1x128xf32> to vector<8x128xf32>
    %25 = arith.addf %22, %24 : vector<8x128xf32>
    %cst_22 = arith.constant 5.000000e-01 : f32
    %26 = vector.broadcast %cst_22 : f32 to vector<8x128xf32>
    %27 = arith.mulf %26, %25 : vector<8x128xf32>
    %cst_23 = arith.constant 0.707106769 : f32
    %28 = vector.broadcast %cst_23 : f32 to vector<8x128xf32>
    %29 = arith.mulf %25, %28 : vector<8x128xf32>
    %30 = math.erf %29 : vector<8x128xf32>
    %cst_24 = arith.constant 1.000000e+00 : f32
    %31 = vector.broadcast %cst_24 : f32 to vector<8x128xf32>
    %32 = arith.addf %31, %30 : vector<8x128xf32>
    %33 = arith.mulf %27, %32 : vector<8x128xf32>
    %c0_25 = arith.constant 0 : index
    %c0_26 = arith.constant 0 : index
    %34 = vector.load %arg7[%c0_25, %c0_26] : memref<8x128xf32, #tpu.memory_space<vmem>>, vector<8x128xf32>
    %c128_27 = arith.constant 128 : index
    %c0_28 = arith.constant 0 : index
    %35 = vector.load %arg4[%c128_27, %c0_28] : memref<256x128xf32, #tpu.memory_space<vmem>>, vector<128x128xf32>
    %cst_29 = arith.constant dense<0.000000e+00> : vector<8x128xf32>
    %36 = tpu.matmul %33, %35, %cst_29 {dimension_numbers = #tpu.dot_dimension_numbers<[1], [0], [0], [1], [0, 0, 1, 1], [], []>} : vector<8x128xf32>, vector<128x128xf32>, vector<8x128xf32> -> vector<8x128xf32>
    %37 = arith.addf %34, %36 : vector<8x128xf32>
    %c0_30 = arith.constant 0 : index
    %c0_31 = arith.constant 0 : index
    %38 = vector.load %arg7[%c0_30, %c0_31] : memref<8x128xf32, #tpu.memory_space<vmem>>, vector<8x128xf32>
    tpu.vector_store %arg7[%c0_30, %c0_31], %37 {strides = array<i32>} : memref<8x128xf32, #tpu.memory_space<vmem>>, vector<8x128xf32>,
    %c0_32 = arith.constant 0 : index
    %c0_33 = arith.constant 0 : index
    %39 = vector.load %arg7[%c0_32, %c0_33] : memref<8x128xf32, #tpu.memory_space<vmem>>, vector<8x128xf32>
    %c0_34 = arith.constant 0 : index
    %c0_35 = arith.constant 0 : index
    %40 = vector.load %arg5[%c0_34, %c0_35] : memref<1x128xf32, #tpu.memory_space<vmem>>, vector<1x128xf32>
    %41 = vector.broadcast %40 : vector<1x128xf32> to vector<8x128xf32>
    %42 = arith.addf %39, %41 : vector<8x128xf32>
    %c0_36 = arith.constant 0 : index
    %c0_37 = arith.constant 0 : index
    %43 = vector.load %arg6[%c0_36, %c0_37] : memref<8x128xf32, #tpu.memory_space<vmem>>, vector<8x128xf32>
    tpu.vector_store %arg6[%c0_36, %c0_37], %42 {strides = array<i32>} : memref<8x128xf32, #tpu.memory_space<vmem>>, vector<8x128xf32>,
    return
  }
  func.func @transform_0(%arg0: i32) -> (i32, i32) {
    %c0_i32 = arith.constant 0 : i32
    %c0_i32_0 = arith.constant 0 : i32
    return %arg0, %c0_i32 : i32, i32
  }
  func.func @transform_1(%arg0: i32) -> (i32, i32) {
    %c0_i32 = arith.constant 0 : i32
    %c0_i32_0 = arith.constant 0 : i32
    %c0_i32_1 = arith.constant 0 : i32
    return %c0_i32, %c0_i32_0 : i32, i32
  }
  func.func @transform_2(%arg0: i32) -> (i32, i32) {
    %c0_i32 = arith.constant 0 : i32
    %c0_i32_0 = arith.constant 0 : i32
    %c0_i32_1 = arith.constant 0 : i32
    return %c0_i32, %c0_i32_0 : i32, i32
  }
  func.func @transform_3(%arg0: i32) -> (i32, i32) {
    %c0_i32 = arith.constant 0 : i32
    %c0_i32_0 = arith.constant 0 : i32
    %c0_i32_1 = arith.constant 0 : i32
    return %c0_i32, %c0_i32_0 : i32, i32
  }
  func.func @transform_4(%arg0: i32) -> (i32, i32) {
    %c0_i32 = arith.constant 0 : i32
    %c0_i32_0 = arith.constant 0 : i32
    %c0_i32_1 = arith.constant 0 : i32
    return %c0_i32, %c0_i32_0 : i32, i32
  }
  func.func @transform_5(%arg0: i32) -> (i32, i32) {
    %c0_i32 = arith.constant 0 : i32
    %c0_i32_0 = arith.constant 0 : i32
    return %arg0, %c0_i32 : i32, i32
  }
}

module attributes {stable_mosaic.version = 11 : i64} {
  func.func @_mlp_kernel(%arg0: i32, %arg1: memref<8x128xf32, #tpu.memory_space<vmem>>, %arg2: memref<128x256xf32, #tpu.memory_space<vmem>>, %arg3: memref<1x256xf32, #tpu.memory_space<vmem>>, %arg4: memref<256x128xf32, #tpu.memory_space<vmem>>, %arg5: memref<1x128xf32, #tpu.memory_space<vmem>>, %arg6: memref<8x128xf32, #tpu.memory_space<vmem>>, %arg7: memref<8x128xf32, #tpu.memory_space<vmem>>) attributes {dimension_semantics = [#tpu.dimension_semantics<parallel>], iteration_bounds = array<i64: 2>, scalar_prefetch = 0 : i64, scratch_operands = 1 : i64, tpu.core_type = #tpu.core_type<tc>, window_params = [{transform_indices = @transform_0, window_bounds = array<i64: 8, 128>}, {pipeline_mode = #tpu.pipeline_mode<synchronous>, transform_indices = @transform_1, window_bounds = array<i64: 128, 256>}, {pipeline_mode = #tpu.pipeline_mode<synchronous>, transform_indices = @transform_2, window_bounds = array<i64: 1, 256>}, {pipeline_mode = #tpu.pipeline_mode<synchronous>, transform_indices = @transform_3, window_bounds = array<i64: 256, 128>}, {pipeline_mode = #tpu.pipeline_mode<synchronous>, transform_indices = @transform_4, window_bounds = array<i64: 1, 128>}, {transform_indices = @transform_5, window_bounds = array<i64: 8, 128>}]} {
    %c0 = arith.constant 0 : index
    %c0_0 = arith.constant 0 : index
    %0 = vector.load %arg1[%c0, %c0_0] : memref<8x128xf32, #tpu.memory_space<vmem>>, vector<8x128xf32>
    %cst = arith.constant 0.000000e+00 : f32
    %1 = vector.broadcast %cst : f32 to vector<8x128xf32>
    %c0_1 = arith.constant 0 : index
    %c0_2 = arith.constant 0 : index
    %2 = vector.load %arg7[%c0_1, %c0_2] : memref<8x128xf32, #tpu.memory_space<vmem>>, vector<8x128xf32>
    tpu.vector_store %arg7[%c0_1, %c0_2], %1 {strides = array<i32>} : memref<8x128xf32, #tpu.memory_space<vmem>>, vector<8x128xf32>,
    %c0_3 = arith.constant 0 : index
    %c0_4 = arith.constant 0 : index
    %3 = vector.load %arg2[%c0_3, %c0_4] : memref<128x256xf32, #tpu.memory_space<vmem>>, vector<128x128xf32>
    %cst_5 = arith.constant dense<0.000000e+00> : vector<8x128xf32>
    %4 = tpu.matmul %0, %3, %cst_5 {dimension_numbers = #tpu.dot_dimension_numbers<[1], [0], [0], [1], [0, 0, 1, 1], [], []>} : vector<8x128xf32>, vector<128x128xf32>, vector<8x128xf32> -> vector<8x128xf32>
    %c0_6 = arith.constant 0 : index
    %c0_7 = arith.constant 0 : index
    %5 = vector.load %arg3[%c0_6, %c0_7] : memref<1x256xf32, #tpu.memory_space<vmem>>, vector<1x128xf32>
    %6 = vector.broadcast %5 : vector<1x128xf32> to vector<8x128xf32>
    %7 = arith.addf %4, %6 : vector<8x128xf32>
    %cst_8 = arith.constant 5.000000e-01 : f32
    %8 = vector.broadcast %cst_8 : f32 to vector<8x128xf32>
    %9 = arith.mulf %8, %7 : vector<8x128xf32>
    %cst_9 = arith.constant 0.707106769 : f32
    %10 = vector.broadcast %cst_9 : f32 to vector<8x128xf32>
    %11 = arith.mulf %7, %10 : vector<8x128xf32>
    %12 = math.erf %11 : vector<8x128xf32>
    %cst_10 = arith.constant 1.000000e+00 : f32
    %13 = vector.broadcast %cst_10 : f32 to vector<8x128xf32>
    %14 = arith.addf %13, %12 : vector<8x128xf32>
    %15 = arith.mulf %9, %14 : vector<8x128xf32>
    %c0_11 = arith.constant 0 : index
    %c0_12 = arith.constant 0 : index
    %16 = vector.load %arg7[%c0_11, %c0_12] : memref<8x128xf32, #tpu.memory_space<vmem>>, vector<8x128xf32>
    %c0_13 = arith.constant 0 : index
    %c0_14 = arith.constant 0 : index
    %17 = vector.load %arg4[%c0_13, %c0_14] : memref<256x128xf32, #tpu.memory_space<vmem>>, vector<128x128xf32>
    %cst_15 = arith.constant dense<0.000000e+00> : vector<8x128xf32>
    %18 = tpu.matmul %15, %17, %cst_15 {dimension_numbers = #tpu.dot_dimension_numbers<[1], [0], [0], [1], [0, 0, 1, 1], [], []>} : vector<8x128xf32>, vector<128x128xf32>, vector<8x128xf32> -> vector<8x128xf32>
    %19 = arith.addf %16, %18 : vector<8x128xf32>
    %c0_16 = arith.constant 0 : index
    %c0_17 = arith.constant 0 : index
    %20 = vector.load %arg7[%c0_16, %c0_17] : memref<8x128xf32, #tpu.memory_space<vmem>>, vector<8x128xf32>
    tpu.vector_store %arg7[%c0_16, %c0_17], %19 {strides = array<i32>} : memref<8x128xf32, #tpu.memory_space<vmem>>, vector<8x128xf32>,
    %c0_18 = arith.constant 0 : index
    %c128 = arith.constant 128 : index
    %21 = vector.load %arg2[%c0_18, %c128] : memref<128x256xf32, #tpu.memory_space<vmem>>, vector<128x128xf32>
    %cst_19 = arith.constant dense<0.000000e+00> : vector<8x128xf32>
    %22 = tpu.matmul %0, %21, %cst_19 {dimension_numbers = #tpu.dot_dimension_numbers<[1], [0], [0], [1], [0, 0, 1, 1], [], []>} : vector<8x128xf32>, vector<128x128xf32>, vector<8x128xf32> -> vector<8x128xf32>
    %c0_20 = arith.constant 0 : index
    %c128_21 = arith.constant 128 : index
    %23 = vector.load %arg3[%c0_20, %c128_21] : memref<1x256xf32, #tpu.memory_space<vmem>>, vector<1x128xf32>
    %24 = vector.broadcast %23 : vector<1x128xf32> to vector<8x128xf32>
    %25 = arith.addf %22, %24 : vector<8x128xf32>
    %cst_22 = arith.constant 5.000000e-01 : f32
    %26 = vector.broadcast %cst_22 : f32 to vector<8x128xf32>
    %27 = arith.mulf %26, %25 : vector<8x128xf32>
    %cst_23 = arith.constant 0.707106769 : f32
    %28 = vector.broadcast %cst_23 : f32 to vector<8x128xf32>
    %29 = arith.mulf %25, %28 : vector<8x128xf32>
    %30 = math.erf %29 : vector<8x128xf32>
    %cst_24 = arith.constant 1.000000e+00 : f32
    %31 = vector.broadcast %cst_24 : f32 to vector<8x128xf32>
    %32 = arith.addf %31, %30 : vector<8x128xf32>
    %33 = arith.mulf %27, %32 : vector<8x128xf32>
    %c0_25 = arith.constant 0 : index
    %c0_26 = arith.constant 0 : index
    %34 = vector.load %arg7[%c0_25, %c0_26] : memref<8x128xf32, #tpu.memory_space<vmem>>, vector<8x128xf32>
    %c128_27 = arith.constant 128 : index
    %c0_28 = arith.constant 0 : index
    %35 = vector.load %arg4[%c128_27, %c0_28] : memref<256x128xf32, #tpu.memory_space<vmem>>, vector<128x128xf32>
    %cst_29 = arith.constant dense<0.000000e+00> : vector<8x128xf32>
    %36 = tpu.matmul %33, %35, %cst_29 {dimension_numbers = #tpu.dot_dimension_numbers<[1], [0], [0], [1], [0, 0, 1, 1], [], []>} : vector<8x128xf32>, vector<128x128xf32>, vector<8x128xf32> -> vector<8x128xf32>
    %37 = arith.addf %34, %36 : vector<8x128xf32>
    %c0_30 = arith.constant 0 : index
    %c0_31 = arith.constant 0 : index
    %38 = vector.load %arg7[%c0_30, %c0_31] : memref<8x128xf32, #tpu.memory_space<vmem>>, vector<8x128xf32>
    tpu.vector_store %arg7[%c0_30, %c0_31], %37 {strides = array<i32>} : memref<8x128xf32, #tpu.memory_space<vmem>>, vector<8x128xf32>,
    %c0_32 = arith.constant 0 : index
    %c0_33 = arith.constant 0 : index
    %39 = vector.load %arg7[%c0_32, %c0_33] : memref<8x128xf32, #tpu.memory_space<vmem>>, vector<8x128xf32>
    %c0_34 = arith.constant 0 : index
    %c0_35 = arith.constant 0 : index
    %40 = vector.load %arg5[%c0_34, %c0_35] : memref<1x128xf32, #tpu.memory_space<vmem>>, vector<1x128xf32>
    %41 = vector.broadcast %40 : vector<1x128xf32> to vector<8x128xf32>
    %42 = arith.addf %39, %41 : vector<8x128xf32>
    %c0_36 = arith.constant 0 : index
    %c0_37 = arith.constant 0 : index
    %43 = vector.load %arg6[%c0_36, %c0_37] : memref<8x128xf32, #tpu.memory_space<vmem>>, vector<8x128xf32>
    tpu.vector_store %arg6[%c0_36, %c0_37], %42 {strides = array<i32>} : memref<8x128xf32, #tpu.memory_space<vmem>>, vector<8x128xf32>,
    return
  }
  func.func @transform_0(%arg0: i32) -> (i32, i32) {
    %c0_i32 = arith.constant 0 : i32
    %c0_i32_0 = arith.constant 0 : i32
    return %arg0, %c0_i32 : i32, i32
  }
  func.func @transform_1(%arg0: i32) -> (i32, i32) {
    %c0_i32 = arith.constant 0 : i32
    %c0_i32_0 = arith.constant 0 : i32
    %c0_i32_1 = arith.constant 0 : i32
    return %c0_i32, %c0_i32_0 : i32, i32
  }
  func.func @transform_2(%arg0: i32) -> (i32, i32) {
    %c0_i32 = arith.constant 0 : i32
    %c0_i32_0 = arith.constant 0 : i32
    %c0_i32_1 = arith.constant 0 : i32
    return %c0_i32, %c0_i32_0 : i32, i32
  }
  func.func @transform_3(%arg0: i32) -> (i32, i32) {
    %c0_i32 = arith.constant 0 : i32
    %c0_i32_0 = arith.constant 0 : i32
    %c0_i32_1 = arith.constant 0 : i32
    return %c0_i32, %c0_i32_0 : i32, i32
  }
  func.func @transform_4(%arg0: i32) -> (i32, i32) {
    %c0_i32 = arith.constant 0 : i32
    %c0_i32_0 = arith.constant 0 : i32
    %c0_i32_1 = arith.constant 0 : i32
    return %c0_i32, %c0_i32_0 : i32, i32
  }
  func.func @transform_5(%arg0: i32) -> (i32, i32) {
    %c0_i32 = arith.constant 0 : i32
    %c0_i32_0 = arith.constant 0 : i32
    return %arg0, %c0_i32 : i32, i32
  }
}

</mosaic_0001>

<llo_original>
// kernel: tpu_custom_call.1
$region0: #{tpu_custom_call.1}
  #allocation0 [shape = 'u32[]', space=smem, size = 0x4, offset = 0x4, fixed_abs, tag = 'smem constant byte address 0x4 - core index']
  #allocation1 [shape = 'u32[144,128]{1,0:T(1,128)}', space=vmem, size = 0x12000, scoped, tag = 'internal scratch']
  #allocation2 [shape = 'f32[8,128]{1,0:T(8,128)}', space=vmem, size = 0x1000, scoped, tag = 'scratch operand']
  %s0 = inlined_call_operand.hbm [shape: f32[16,128], index: 0, kind: input, shape index: {}]
  %s1 = inlined_call_operand.hbm [shape: f32[128,256], index: 1, kind: input, shape index: {}]
  %s2 = inlined_call_operand.vmem [shape: f32[1,256], index: 2, kind: input, shape index: {}]
  %s3 = inlined_call_operand.hbm [shape: f32[256,128], index: 3, kind: input, shape index: {}]
  %s4 = inlined_call_operand.vmem [shape: f32[1,128], index: 4, kind: input, shape index: {}]
  %s5 = inlined_call_operand.hbm [shape: f32[16,128], index: 5, kind: output, shape index: {}]
  %s6 = sld [smem:[#allocation0]]
  $region65: #{tpu_custom_call.1} parent=0
    _
  %s8 = ssub.s32 1, %s6
  %s9 = scalar_select 0, %s8, %s6
  $region1: #{tpu_custom_call.1} parent=0
    #allocation3 [shape = 'u8[8192]{0}', space=vmem, size = 0x2000, scoped, tag = 'input window, operand 0']
    #allocation4 [shape = 's32[2]{0}', space=sflag, size = 0x8, scoped, tag = 'scoped memory for tpu_custom_call.1']
    #allocation5 [shape = 's32[2]{0}', space=sflag, size = 0x8, scoped, tag = 'scoped memory for tpu_custom_call.1']
    #allocation6 [shape = 'u8[131072]{0}', space=vmem, size = 0x20000, scoped, tag = 'input window, operand 1, single buffered']
    #allocation7 [shape = 's32[1]{0}', space=sflag, size = 0x4, scoped, tag = 'scoped memory for tpu_custom_call.1']
    #allocation8 [shape = 'u8[131072]{0}', space=vmem, size = 0x20000, scoped, tag = 'input window, operand 3, single buffered']
    #allocation9 [shape = 'u8[8192]{0}', space=vmem, size = 0x2000, scoped, tag = 'output window, operand 0']
    %10 = vsyncpa [#allocation4], 0
    %s11 = scalar_lea.sflag [#allocation4], 1
    %12 = vsyncpa %s11, 0
    %13 = vsyncpa [#allocation7], 0
    %14 = vsyncpa [#allocation5], 0
    %s15 = scalar_lea.sflag [#allocation5], 1
    %16 = vsyncpa %s15, 0
    loop: start=0, step=1, limit=4
    $region2: #{tpu_custom_call.1} parent=1 // loop_pre_header
      _
    $region3: #{tpu_custom_call.1} parent=1 // loop_header
      %s18 = sphi 0, %s22
      %p19 = scmp.ge.s32.totalorder %s18, 4
      %s28 = sphi 0, %s30
      %s31 = sphi 0, %s28
      %s32 = sphi 0, %s31
      %s48 = sphi 0, %s32
      %s52 = sphi 0, %s52
      %s54 = sphi 0, %s52
      %s55 = sphi 0, %s54
      %s69 = sphi 0, %s55
      %s73 = sphi 0, %s73
      %s75 = sphi 0, %s73
      %s76 = sphi 0, %s75
      %s90 = sphi 0, %s76
      %s94 = sphi 0, %s94
      %s96 = sphi 0, %s94
      %s97 = sphi 0, %s96
      %s111 = sphi 0, %s97
      %s115 = sphi 0, %s115
      %s117 = sphi 0, %s115
      %s118 = sphi 0, %s117
      %s132 = sphi 0, %s118
      %s138 = sphi 0, %s140
      %s141 = sphi 0, %s138
      %s142 = sphi 0, %s141
      %s158 = sphi 0, %s142
    $region4: #{tpu_custom_call.1} parent=1 // loop_header_branch
      %21 = sbr.rel (%p19) target = $region8
    $region5: #{tpu_custom_call.1} parent=1 // loop_body
      %s23 = ssub.s32 %s18, 1
      %s24 = ssub.s32 %s18, 2
      %s25 = sadd.s32 %s18, 1
      %s26 = ssub.s32 %s18, %s25
      %p27 = scmp.eq.s32.totalorder %s26, 0
      %s29 = sadd.s32 %s28, 1
      %s30 = scalar_select %p27, %s28, %s29
      %p33 = pneg %p27
      %p34 = scmp.eq.s32.totalorder %s18, 1
      %p35 = por %p33, %p34
      %p36 = scmp.ne.s32.totalorder %s28, %s31
      %p37 = scmp.eq.s32.totalorder %s18, 0
      %p38 = por %p36, %p37
      %p39 = scmp.ne.s32.totalorder %s28, %s31
      %p40 = scmp.eq.s32.totalorder %s23, 1
      %p41 = por %p39, %p40
      %p42 = scmp.ne.s32.totalorder %s31, %s32
      %p43 = scmp.eq.s32.totalorder %s23, 0
      %p44 = por %p42, %p43
      %p45 = scmp.ne.s32.totalorder %s31, %s32
      %p46 = scmp.eq.s32.totalorder %s24, 1
      %p47 = por %p45, %p46
      %p49 = scmp.ne.s32.totalorder %s32, %s48
      %p50 = scmp.eq.s32.totalorder %s24, 0
      %p51 = por %p49, %p50
      %s53 = sadd.s32 %s52, 1
      %p56 = scmp.eq.s32.totalorder %s18, 1
      %p57 = scmp.ne.s32.totalorder %s52, %s54
      %p58 = scmp.eq.s32.totalorder %s18, 0
      %p59 = por %p57, %p58
      %p60 = scmp.ne.s32.totalorder %s52, %s54
      %p61 = scmp.eq.s32.totalorder %s23, 1
      %p62 = por %p60, %p61
      %p63 = scmp.ne.s32.totalorder %s54, %s55
      %p64 = scmp.eq.s32.totalorder %s23, 0
      %p65 = por %p63, %p64
      %p66 = scmp.ne.s32.totalorder %s54, %s55
      %p67 = scmp.eq.s32.totalorder %s24, 1
      %p68 = por %p66, %p67
      %p70 = scmp.ne.s32.totalorder %s55, %s69
      %p71 = scmp.eq.s32.totalorder %s24, 0
      %p72 = por %p70, %p71
      %s74 = sadd.s32 %s73, 1
      %p77 = scmp.eq.s32.totalorder %s18, 1
      %p78 = scmp.ne.s32.totalorder %s73, %s75
      %p79 = scmp.eq.s32.totalorder %s18, 0
      %p80 = por %p78, %p79
      %p81 = scmp.ne.s32.totalorder %s73, %s75
      %p82 = scmp.eq.s32.totalorder %s23, 1
      %p83 = por %p81, %p82
      %p84 = scmp.ne.s32.totalorder %s75, %s76
      %p85 = scmp.eq.s32.totalorder %s23, 0
      %p86 = por %p84, %p85
      %p87 = scmp.ne.s32.totalorder %s75, %s76
      %p88 = scmp.eq.s32.totalorder %s24, 1
      %p89 = por %p87, %p88
      %p91 = scmp.ne.s32.totalorder %s76, %s90
      %p92 = scmp.eq.s32.totalorder %s24, 0
      %p93 = por %p91, %p92
      %s95 = sadd.s32 %s94, 1
      %p98 = scmp.eq.s32.totalorder %s18, 1
      %p99 = scmp.ne.s32.totalorder %s94, %s96
      %p100 = scmp.eq.s32.totalorder %s18, 0
      %p101 = por %p99, %p100
      %p102 = scmp.ne.s32.totalorder %s94, %s96
      %p103 = scmp.eq.s32.totalorder %s23, 1
      %p104 = por %p102, %p103
      %p105 = scmp.ne.s32.totalorder %s96, %s97
      %p106 = scmp.eq.s32.totalorder %s23, 0
      %p107 = por %p105, %p106
      %p108 = scmp.ne.s32.totalorder %s96, %s97
      %p109 = scmp.eq.s32.totalorder %s24, 1
      %p110 = por %p108, %p109
      %p112 = scmp.ne.s32.totalorder %s97, %s111
      %p113 = scmp.eq.s32.totalorder %s24, 0
      %p114 = por %p112, %p113
      %s116 = sadd.s32 %s115, 1
      %p119 = scmp.eq.s32.totalorder %s18, 1
      %p120 = scmp.ne.s32.totalorder %s115, %s117
      %p121 = scmp.eq.s32.totalorder %s18, 0
      %p122 = por %p120, %p121
      %p123 = scmp.ne.s32.totalorder %s115, %s117
      %p124 = scmp.eq.s32.totalorder %s23, 1
      %p125 = por %p123, %p124
      %p126 = scmp.ne.s32.totalorder %s117, %s118
      %p127 = scmp.eq.s32.totalorder %s23, 0
      %p128 = por %p126, %p127
      %p129 = scmp.ne.s32.totalorder %s117, %s118
      %p130 = scmp.eq.s32.totalorder %s24, 1
      %p131 = por %p129, %p130
      %p133 = scmp.ne.s32.totalorder %s118, %s132
      %p134 = scmp.eq.s32.totalorder %s24, 0
      %p135 = por %p133, %p134
      %s136 = ssub.s32 %s18, %s25
      %p137 = scmp.eq.s32.totalorder %s136, 0
      %s139 = sadd.s32 %s138, 1
      %s140 = scalar_select %p137, %s138, %s139
      %p143 = pneg %p137
      %p144 = scmp.eq.s32.totalorder %s18, 1
      %p145 = por %p143, %p144
      %p146 = scmp.ne.s32.totalorder %s138, %s141
      %p147 = scmp.eq.s32.totalorder %s18, 0
      %p148 = por %p146, %p147
      %p149 = scmp.ne.s32.totalorder %s138, %s141
      %p150 = scmp.eq.s32.totalorder %s23, 1
      %p151 = por %p149, %p150
      %p152 = scmp.ne.s32.totalorder %s141, %s142
      %p153 = scmp.eq.s32.totalorder %s23, 0
      %p154 = por %p152, %p153
      %p155 = scmp.ne.s32.totalorder %s141, %s142
      %p156 = scmp.eq.s32.totalorder %s24, 1
      %p157 = por %p155, %p156
      %p159 = scmp.ne.s32.totalorder %s142, %s158
      %p160 = scmp.eq.s32.totalorder %s24, 0
      %p161 = por %p159, %p160
      %p162 = scmp.le.s32.totalorder 1, %s18
      %p163 = scmp.lt.s32.totalorder %s18, 3
      %p164 = pnand %p162, %p163
      %p165 = pneg %p164
      // Predicated region
      $region9: #{tpu_custom_call.1} parent=5 // pred_check
        _
      $region10: #{tpu_custom_call.1} parent=5 // pred_check_branch
        %167 = sbr.rel (%p164) target = $region12
      $region11: #{tpu_custom_call.1} parent=5 // pred_region
        %s168 = ssub.s32 %s18, 1
        // Predicated region
        $region13: #{tpu_custom_call.1} parent=11 // pred_check
          %p169 = pneg %p65
        $region14: #{tpu_custom_call.1} parent=11 // pred_check_branch
          %171 = sbr.rel (%p169) target = $region16
        $region15: #{tpu_custom_call.1} parent=11 // pred_region
          %s173 = ssub.s32 4096, 4096
          %174 = vsyncadd [#allocation7], %s173
          %s175 = sshll.u32 [#allocation6], 4
          %s176 = int_to_ptr.vmem [resolvable:$true] %s175
          %181 = dma.hbm_to_vmem [thread:$0]  %s1, 4096, %s176, [#allocation7], 256, 256, 16
        $region16: #{tpu_custom_call.1} parent=11 // pred_fallthru
          _
        // Predicated region
        $region17: #{tpu_custom_call.1} parent=11 // pred_check
          %p182 = pneg %p86
        $region18: #{tpu_custom_call.1} parent=11 // pred_check_branch
          %184 = sbr.rel (%p182) target = $region20
        $region19: #{tpu_custom_call.1} parent=11 // pred_region
          _
        $region20: #{tpu_custom_call.1} parent=11 // pred_fallthru
          _
        // Predicated region
        $region21: #{tpu_custom_call.1} parent=11 // pred_check
          %p185 = pneg %p107
        $region22: #{tpu_custom_call.1} parent=11 // pred_check_branch
          %187 = sbr.rel (%p185) target = $region24
        $region23: #{tpu_custom_call.1} parent=11 // pred_region
          %s189 = ssub.s32 4096, 4096
          %190 = vsyncadd [#allocation7], %s189
          %s191 = sshll.u32 [#allocation8], 4
          %s192 = int_to_ptr.vmem [resolvable:$true] %s191
          %197 = dma.hbm_to_vmem [thread:$0]  %s3, 4096, %s192, [#allocation7], 128, 128, 8
        $region24: #{tpu_custom_call.1} parent=11 // pred_fallthru
          _
        // Predicated region
        $region25: #{tpu_custom_call.1} parent=11 // pred_check
          %p198 = pneg %p128
        $region26: #{tpu_custom_call.1} parent=11 // pred_check_branch
          %200 = sbr.rel (%p198) target = $region28
        $region27: #{tpu_custom_call.1} parent=11 // pred_region
          _
        $region28: #{tpu_custom_call.1} parent=11 // pred_fallthru
          _
      $region12: #{tpu_custom_call.1} parent=5 // pred_fallthru
        _
      %p201 = scmp.lt.s32.totalorder %s18, 2
      // Predicated region
      $region29: #{tpu_custom_call.1} parent=5 // pred_check
        %p202 = pneg %p201
      $region30: #{tpu_custom_call.1} parent=5 // pred_check_branch
        %204 = sbr.rel (%p202) target = $region32
      $region31: #{tpu_custom_call.1} parent=5 // pred_region
        // Predicated region
        $region33: #{tpu_custom_call.1} parent=31 // pred_check
          %p205 = pneg %p38
        $region34: #{tpu_custom_call.1} parent=31 // pred_check_branch
          %207 = sbr.rel (%p205) target = $region36
        $region35: #{tpu_custom_call.1} parent=31 // pred_region
          %s208 = sand.u32 %s28, 1
          %s209 = scalar_lea.sflag [#allocation4], %s208
          %s210 = sand.u32 %s28, 1
          %s211 = smul.addr %s210, 8
          %s212 = scalar_lea.vmem [#allocation3], %s211
          %s214 = ssub.s32 128, 128
          %215 = vsyncadd %s209, %s214
          %s216 = smul.addr %s18, 128
          %s217 = scalar_lea.hbm %s0, %s216
          %s219 = sshll.u32 %s212, 4
          %s220 = int_to_ptr.vmem [resolvable:$true] %s219
          %222 = dma.hbm_to_vmem [thread:$0]  %s217, 128, %s220, %s209
        $region36: #{tpu_custom_call.1} parent=31 // pred_fallthru
          _
      $region32: #{tpu_custom_call.1} parent=5 // pred_fallthru
        _
      %p223 = scmp.le.s32.totalorder 1, %s18
      %p224 = scmp.lt.s32.totalorder %s18, 3
      %p225 = pnand %p223, %p224
      %p226 = pneg %p225
      // Predicated region
      $region37: #{tpu_custom_call.1} parent=5 // pred_check
        _
      $region38: #{tpu_custom_call.1} parent=5 // pred_check_branch
        %228 = sbr.rel (%p225) target = $region40
      $region39: #{tpu_custom_call.1} parent=5 // pred_region
        %s229 = ssub.s32 %s18, 1
        %s230 = sand.u32 %s31, 1
        %s231 = scalar_lea.sflag [#allocation4], %s230
        %s232 = sand.u32 %s31, 1
        %s233 = smul.addr %s232, 8
        %s234 = scalar_lea.vmem [#allocation3], %s233
        // Predicated region
        $region41: #{tpu_custom_call.1} parent=39 // pred_check
          %p235 = pneg %p44
        $region42: #{tpu_custom_call.1} parent=39 // pred_check_branch
          %237 = sbr.rel (%p235) target = $region44
        $region43: #{tpu_custom_call.1} parent=39 // pred_region
          %238 = dma.done %s231, 128
        $region44: #{tpu_custom_call.1} parent=39 // pred_fallthru
          _
        // Predicated region
        $region45: #{tpu_custom_call.1} parent=39 // pred_check
          %p239 = pneg %p65
        $region46: #{tpu_custom_call.1} parent=39 // pred_check_branch
          %241 = sbr.rel (%p239) target = $region48
        $region47: #{tpu_custom_call.1} parent=39 // pred_region
          %242 = dma.done [#allocation7], 4096
        $region48: #{tpu_custom_call.1} parent=39 // pred_fallthru
          _
        // Predicated region
        $region49: #{tpu_custom_call.1} parent=39 // pred_check
          %p243 = pneg %p107
        $region50: #{tpu_custom_call.1} parent=39 // pred_check_branch
          %245 = sbr.rel (%p243) target = $region52
        $region51: #{tpu_custom_call.1} parent=39 // pred_region
          %246 = dma.done [#allocation7], 4096
        $region52: #{tpu_custom_call.1} parent=39 // pred_fallthru
          _
        %s247 = sand.u32 %s31, 1
        %s248 = scalar_lea.sflag [#allocation4], %s247
        %s249 = sand.u32 %s31, 1
        %s250 = smul.addr %s249, 8
        %s251 = scalar_lea.vmem [#allocation3], %s250
        %p252 = pneg %p44
        %p253 = pneg %p41
        %p254 = pneg %p65
        %p255 = pneg %p62
        %p256 = pneg %p86
        %p257 = pneg %p83
        %p258 = pneg %p107
        %p259 = pneg %p104
        %p260 = pneg %p128
        %p261 = pneg %p125
        %p262 = pneg %p154
        %p263 = pneg %p151
        %s264 = sand.u32 %s141, 1
        %s265 = scalar_lea.sflag [#allocation5], %s264
        %s266 = sand.u32 %s141, 1
        %s267 = smul.addr %s266, 8
        %s268 = scalar_lea.vmem [#allocation9], %s267
        %v269 = vld [vmem:[%s234] sm:$0xff]
        %270 = vst [vmem:[#allocation2] sm:$0xff] 0.0
        %v271 = vld [vmem:[#allocation6] sm:$0xff]
        %v272 = vld [vmem:[#allocation6 + $0x10] sm:$0xff]
        %v273 = vld [vmem:[#allocation6 + $0x20] sm:$0xff]
        %v274 = vld [vmem:[#allocation6 + $0x30] sm:$0xff]
        %v275 = vld [vmem:[#allocation6 + $0x40] sm:$0xff]
        %v276 = vld [vmem:[#allocation6 + $0x50] sm:$0xff]
        %v277 = vld [vmem:[#allocation6 + $0x60] sm:$0xff]
        %v278 = vld [vmem:[#allocation6 + $0x70] sm:$0xff]
        %v279 = vld [vmem:[#allocation6 + $0x80] sm:$0xff]
        %v280 = vld [vmem:[#allocation6 + $0x90] sm:$0xff]
        %v281 = vld [vmem:[#allocation6 + $0xa0] sm:$0xff]
        %v282 = vld [vmem:[#allocation6 + $0xb0] sm:$0xff]
        %v283 = vld [vmem:[#allocation6 + $0xc0] sm:$0xff]
        %v284 = vld [vmem:[#allocation6 + $0xd0] sm:$0xff]
        %v285 = vld [vmem:[#allocation6 + $0xe0] sm:$0xff]
        %v286 = vld [vmem:[#allocation6 + $0xf0] sm:$0xff]
        %v287 = vld [vmem:[%s2] sm:$0x1]
        %v289 = vlaneseq
        %v290 = vshrl.u32 %v289, 7
        %v291 = vsub.s32 0, %v290
        %v292 = vrot.slane %v287, %v291
        %294 = vmatprep.subr.mxu0 0.0
        %295 = vmatpush1.msra.mxu0 %v271
        %296 = vmatprep.subr.mxu0 0.0
        %297 = vmatpush1.msra.mxu0 %v272
        %298 = vmatprep.subr.mxu0 0.0
        %299 = vmatpush1.msra.mxu0 %v273
        %300 = vmatprep.subr.mxu0 0.0
        %301 = vmatpush1.msra.mxu0 %v274
        %302 = vmatprep.subr.mxu0 0.0
        %303 = vmatpush1.msra.mxu0 %v275
        %304 = vmatprep.subr.mxu0 0.0
        %305 = vmatpush1.msra.mxu0 %v276
        %306 = vmatprep.subr.mxu0 0.0
        %307 = vmatpush1.msra.mxu0 %v277
        %308 = vmatprep.subr.mxu0 0.0
        %309 = vmatpush1.msra.mxu0 %v278
        %310 = vmatprep.subr.mxu0 0.0
        %311 = vmatpush1.msra.mxu0 %v279
        %312 = vmatprep.subr.mxu0 0.0
        %313 = vmatpush1.msra.mxu0 %v280
        %314 = vmatprep.subr.mxu0 0.0
        %315 = vmatpush1.msra.mxu0 %v281
        %316 = vmatprep.subr.mxu0 0.0
        %317 = vmatpush1.msra.mxu0 %v282
        %318 = vmatprep.subr.mxu0 0.0
        %319 = vmatpush1.msra.mxu0 %v283
        %320 = vmatprep.subr.mxu0 0.0
        %321 = vmatpush1.msra.mxu0 %v284
        %322 = vmatprep.subr.mxu0 0.0
        %323 = vmatpush1.msra.mxu0 %v285
        %324 = vmatprep.subr.mxu0 0.0
        %325 = vmatpush1.msra.mxu0 %v286
        %326 = vmatprep.subr.mxu0 0.0
        %327 = vmatpush1.msra.mxu0 0.0
        %328 = vmatprep.subr.mxu0 0.0
        %329 = vmatpush1.msra.mxu0 0.0
        %330 = vmatprep.subr.mxu0 0.0
        %331 = vmatpush1.msra.mxu0 0.0
        %332 = vmatprep.subr.mxu0 0.0
        %333 = vmatpush1.msra.mxu0 0.0
        %334 = vmatprep.subr.mxu0 0.0
        %335 = vmatpush1.msra.mxu0 0.0
        %336 = vmatprep.subr.mxu0 0.0
        %337 = vmatpush1.msra.mxu0 0.0
        %338 = vmatprep.subr.mxu0 0.0
        %339 = vmatpush1.msra.mxu0 0.0
        %340 = vmatprep.subr.mxu0 0.0
        %341 = vmatpush1.msra.mxu0 0.0
        %342 = vmatprep.subr.mxu0 0.0
        %343 = vmatpush1.msra.mxu0 0.0
        %344 = vmatprep.subr.mxu0 0.0
        %345 = vmatpush1.msra.mxu0 0.0
        %346 = vmatprep.subr.mxu0 0.0
        %347 = vmatpush1.msra.mxu0 0.0
        %348 = vmatprep.subr.mxu0 0.0
        %349 = vmatpush1.msra.mxu0 0.0
        %350 = vmatprep.subr.mxu0 0.0
        %351 = vmatpush1.msra.mxu0 0.0
        %352 = vmatprep.subr.mxu0 0.0
        %353 = vmatpush1.msra.mxu0 0.0
        %354 = vmatprep.subr.mxu0 0.0
        %355 = vmatpush1.msra.mxu0 0.0
        %356 = vmatprep.subr.mxu0 0.0
        %357 = vmatpush1.msra.mxu0 0.0
        %358 = vmatprep.mubr.f32.mxu0 0.0
        %359 = vmatmul.mubr.f32.gmra.mrb[0].mxu0 %v269
        %v360 = vpop.f32.mrb[0].mxu0
        %v361 = vadd.f32 %v292, %v360
        %v362 = vpop.f32.mrb[0].mxu0
        %363 = vdwg.mxu0
        %v364 = vmul.f32 %v361, 0.5
        %v365 = vmul.f32 %v361, 0.70710677
        %v366 = verf.f32.pop %v365
        %v367 = vadd.f32 %v366, 1.0
        %v368 = vmul.f32 %v364, %v367
        %v369 = vld [vmem:[#allocation2] sm:$0xff]
        %v370 = vld [vmem:[#allocation8] sm:$0xff]
        %v371 = vld [vmem:[#allocation8 + $0x8] sm:$0xff]
        %v372 = vld [vmem:[#allocation8 + $0x10] sm:$0xff]
        %v373 = vld [vmem:[#allocation8 + $0x18] sm:$0xff]
        %v374 = vld [vmem:[#allocation8 + $0x20] sm:$0xff]
        %v375 = vld [vmem:[#allocation8 + $0x28] sm:$0xff]
        %v376 = vld [vmem:[#allocation8 + $0x30] sm:$0xff]
        %v377 = vld [vmem:[#allocation8 + $0x38] sm:$0xff]
        %v378 = vld [vmem:[#allocation8 + $0x40] sm:$0xff]
        %v379 = vld [vmem:[#allocation8 + $0x48] sm:$0xff]
        %v380 = vld [vmem:[#allocation8 + $0x50] sm:$0xff]
        %v381 = vld [vmem:[#allocation8 + $0x58] sm:$0xff]
        %v382 = vld [vmem:[#allocation8 + $0x60] sm:$0xff]
        %v383 = vld [vmem:[#allocation8 + $0x68] sm:$0xff]
        %v384 = vld [vmem:[#allocation8 + $0x70] sm:$0xff]
        %v385 = vld [vmem:[#allocation8 + $0x78] sm:$0xff]
        %386 = vmatprep.subr.mxu0 0.0
        %387 = vmatpush1.msra.mxu0 %v370
        %388 = vmatprep.subr.mxu0 0.0
        %389 = vmatpush1.msra.mxu0 %v371
        %390 = vmatprep.subr.mxu0 0.0
        %391 = vmatpush1.msra.mxu0 %v372
        %392 = vmatprep.subr.mxu0 0.0
        %393 = vmatpush1.msra.mxu0 %v373
        %394 = vmatprep.subr.mxu0 0.0
        %395 = vmatpush1.msra.mxu0 %v374
        %396 = vmatprep.subr.mxu0 0.0
        %397 = vmatpush1.msra.mxu0 %v375
        %398 = vmatprep.subr.mxu0 0.0
        %399 = vmatpush1.msra.mxu0 %v376
        %400 = vmatprep.subr.mxu0 0.0
        %401 = vmatpush1.msra.mxu0 %v377
        %402 = vmatprep.subr.mxu0 0.0
        %403 = vmatpush1.msra.mxu0 %v378
        %404 = vmatprep.subr.mxu0 0.0
        %405 = vmatpush1.msra.mxu0 %v379
        %406 = vmatprep.subr.mxu0 0.0
        %407 = vmatpush1.msra.mxu0 %v380
        %408 = vmatprep.subr.mxu0 0.0
        %409 = vmatpush1.msra.mxu0 %v381
        %410 = vmatprep.subr.mxu0 0.0
        %411 = vmatpush1.msra.mxu0 %v382
        %412 = vmatprep.subr.mxu0 0.0
        %413 = vmatpush1.msra.mxu0 %v383
        %414 = vmatprep.subr.mxu0 0.0
        %415 = vmatpush1.msra.mxu0 %v384
        %416 = vmatprep.subr.mxu0 0.0
        %417 = vmatpush1.msra.mxu0 %v385
        %418 = vmatprep.subr.mxu0 0.0
        %419 = vmatpush1.msra.mxu0 0.0
        %420 = vmatprep.subr.mxu0 0.0
        %421 = vmatpush1.msra.mxu0 0.0
        %422 = vmatprep.subr.mxu0 0.0
        %423 = vmatpush1.msra.mxu0 0.0
        %424 = vmatprep.subr.mxu0 0.0
        %425 = vmatpush1.msra.mxu0 0.0
        %426 = vmatprep.subr.mxu0 0.0
        %427 = vmatpush1.msra.mxu0 0.0
        %428 = vmatprep.subr.mxu0 0.0
        %429 = vmatpush1.msra.mxu0 0.0
        %430 = vmatprep.subr.mxu0 0.0
        %431 = vmatpush1.msra.mxu0 0.0
        %432 = vmatprep.subr.mxu0 0.0
        %433 = vmatpush1.msra.mxu0 0.0
        %434 = vmatprep.subr.mxu0 0.0
        %435 = vmatpush1.msra.mxu0 0.0
        %436 = vmatprep.subr.mxu0 0.0
        %437 = vmatpush1.msra.mxu0 0.0
        %438 = vmatprep.subr.mxu0 0.0
        %439 = vmatpush1.msra.mxu0 0.0
        %440 = vmatprep.subr.mxu0 0.0
        %441 = vmatpush1.msra.mxu0 0.0
        %442 = vmatprep.subr.mxu0 0.0
        %443 = vmatpush1.msra.mxu0 0.0
        %444 = vmatprep.subr.mxu0 0.0
        %445 = vmatpush1.msra.mxu0 0.0
        %446 = vmatprep.subr.mxu0 0.0
        %447 = vmatpush1.msra.mxu0 0.0
        %448 = vmatprep.subr.mxu0 0.0
        %449 = vmatpush1.msra.mxu0 0.0
        %450 = vmatprep.mubr.f32.mxu0 0.0
        %451 = vmatmul.mubr.f32.gmra.mrb[0].mxu0 %v368
        %v452 = vpop.f32.mrb[0].mxu0
        %v453 = vadd.f32 0.0, %v452
        %v454 = vpop.f32.mrb[0].mxu0
        %455 = vdwg.mxu0
        %v456 = vadd.f32 %v369, %v453
        %457 = vst [vmem:[#allocation2] sm:$0xff] %v456
        %v458 = vld [vmem:[#allocation6 + $0x8] sm:$0xff]
        %v459 = vld [vmem:[#allocation6 + $0x18] sm:$0xff]
        %v460 = vld [vmem:[#allocation6 + $0x28] sm:$0xff]
        %v461 = vld [vmem:[#allocation6 + $0x38] sm:$0xff]
        %v462 = vld [vmem:[#allocation6 + $0x48] sm:$0xff]
        %v463 = vld [vmem:[#allocation6 + $0x58] sm:$0xff]
        %v464 = vld [vmem:[#allocation6 + $0x68] sm:$0xff]
        %v465 = vld [vmem:[#allocation6 + $0x78] sm:$0xff]
        %v466 = vld [vmem:[#allocation6 + $0x88] sm:$0xff]
        %v467 = vld [vmem:[#allocation6 + $0x98] sm:$0xff]
        %v468 = vld [vmem:[#allocation6 + $0xa8] sm:$0xff]
        %v469 = vld [vmem:[#allocation6 + $0xb8] sm:$0xff]
        %v470 = vld [vmem:[#allocation6 + $0xc8] sm:$0xff]
        %v471 = vld [vmem:[#allocation6 + $0xd8] sm:$0xff]
        %v472 = vld [vmem:[#allocation6 + $0xe8] sm:$0xff]
        %v473 = vld [vmem:[#allocation6 + $0xf8] sm:$0xff]
        %v474 = vld [vmem:[%s2 + $0x1] sm:$0x1]
        %v476 = vlaneseq
        %v477 = vshrl.u32 %v476, 7
        %v478 = vsub.s32 0, %v477
        %v479 = vrot.slane %v474, %v478
        %481 = vmatprep.subr.mxu0 0.0
        %482 = vmatpush1.msra.mxu0 %v458
        %483 = vmatprep.subr.mxu0 0.0
        %484 = vmatpush1.msra.mxu0 %v459
        %485 = vmatprep.subr.mxu0 0.0
        %486 = vmatpush1.msra.mxu0 %v460
        %487 = vmatprep.subr.mxu0 0.0
        %488 = vmatpush1.msra.mxu0 %v461
        %489 = vmatprep.subr.mxu0 0.0
        %490 = vmatpush1.msra.mxu0 %v462
        %491 = vmatprep.subr.mxu0 0.0
        %492 = vmatpush1.msra.mxu0 %v463
        %493 = vmatprep.subr.mxu0 0.0
        %494 = vmatpush1.msra.mxu0 %v464
        %495 = vmatprep.subr.mxu0 0.0
        %496 = vmatpush1.msra.mxu0 %v465
        %497 = vmatprep.subr.mxu0 0.0
        %498 = vmatpush1.msra.mxu0 %v466
        %499 = vmatprep.subr.mxu0 0.0
        %500 = vmatpush1.msra.mxu0 %v467
        %501 = vmatprep.subr.mxu0 0.0
        %502 = vmatpush1.msra.mxu0 %v468
        %503 = vmatprep.subr.mxu0 0.0
        %504 = vmatpush1.msra.mxu0 %v469
        %505 = vmatprep.subr.mxu0 0.0
        %506 = vmatpush1.msra.mxu0 %v470
        %507 = vmatprep.subr.mxu0 0.0
        %508 = vmatpush1.msra.mxu0 %v471
        %509 = vmatprep.subr.mxu0 0.0
        %510 = vmatpush1.msra.mxu0 %v472
        %511 = vmatprep.subr.mxu0 0.0
        %512 = vmatpush1.msra.mxu0 %v473
        %513 = vmatprep.subr.mxu0 0.0
        %514 = vmatpush1.msra.mxu0 0.0
        %515 = vmatprep.subr.mxu0 0.0
        %516 = vmatpush1.msra.mxu0 0.0
        %517 = vmatprep.subr.mxu0 0.0
        %518 = vmatpush1.msra.mxu0 0.0
        %519 = vmatprep.subr.mxu0 0.0
        %520 = vmatpush1.msra.mxu0 0.0
        %521 = vmatprep.subr.mxu0 0.0
        %522 = vmatpush1.msra.mxu0 0.0
        %523 = vmatprep.subr.mxu0 0.0
        %524 = vmatpush1.msra.mxu0 0.0
        %525 = vmatprep.subr.mxu0 0.0
        %526 = vmatpush1.msra.mxu0 0.0
        %527 = vmatprep.subr.mxu0 0.0
        %528 = vmatpush1.msra.mxu0 0.0
        %529 = vmatprep.subr.mxu0 0.0
        %530 = vmatpush1.msra.mxu0 0.0
        %531 = vmatprep.subr.mxu0 0.0
        %532 = vmatpush1.msra.mxu0 0.0
        %533 = vmatprep.subr.mxu0 0.0
        %534 = vmatpush1.msra.mxu0 0.0
        %535 = vmatprep.subr.mxu0 0.0
        %536 = vmatpush1.msra.mxu0 0.0
        %537 = vmatprep.subr.mxu0 0.0
        %538 = vmatpush1.msra.mxu0 0.0
        %539 = vmatprep.subr.mxu0 0.0
        %540 = vmatpush1.msra.mxu0 0.0
        %541 = vmatprep.subr.mxu0 0.0
        %542 = vmatpush1.msra.mxu0 0.0
        %543 = vmatprep.subr.mxu0 0.0
        %544 = vmatpush1.msra.mxu0 0.0
        %545 = vmatprep.mubr.f32.mxu0 0.0
        %546 = vmatmul.mubr.f32.gmra.mrb[0].mxu0 %v269
        %v547 = vpop.f32.mrb[0].mxu0
        %v548 = vadd.f32 %v479, %v547
        %v549 = vpop.f32.mrb[0].mxu0
        %550 = vdwg.mxu0
        %v551 = vmul.f32 %v548, 0.5
        %v552 = vmul.f32 %v548, 0.70710677
        %v553 = verf.f32.pop %v552
        %v554 = vadd.f32 %v553, 1.0
        %v555 = vmul.f32 %v551, %v554
        %v556 = vld [vmem:[#allocation2] sm:$0xff]
        %v557 = vld [vmem:[#allocation8 + $0x80] sm:$0xff]
        %v558 = vld [vmem:[#allocation8 + $0x88] sm:$0xff]
        %v559 = vld [vmem:[#allocation8 + $0x90] sm:$0xff]
        %v560 = vld [vmem:[#allocation8 + $0x98] sm:$0xff]
        %v561 = vld [vmem:[#allocation8 + $0xa0] sm:$0xff]
        %v562 = vld [vmem:[#allocation8 + $0xa8] sm:$0xff]
        %v563 = vld [vmem:[#allocation8 + $0xb0] sm:$0xff]
        %v564 = vld [vmem:[#allocation8 + $0xb8] sm:$0xff]
        %v565 = vld [vmem:[#allocation8 + $0xc0] sm:$0xff]
        %v566 = vld [vmem:[#allocation8 + $0xc8] sm:$0xff]
        %v567 = vld [vmem:[#allocation8 + $0xd0] sm:$0xff]
        %v568 = vld [vmem:[#allocation8 + $0xd8] sm:$0xff]
        %v569 = vld [vmem:[#allocation8 + $0xe0] sm:$0xff]
        %v570 = vld [vmem:[#allocation8 + $0xe8] sm:$0xff]
        %v571 = vld [vmem:[#allocation8 + $0xf0] sm:$0xff]
        %v572 = vld [vmem:[#allocation8 + $0xf8] sm:$0xff]
        %573 = vmatprep.subr.mxu0 0.0
        %574 = vmatpush1.msra.mxu0 %v557
        %575 = vmatprep.subr.mxu0 0.0
        %576 = vmatpush1.msra.mxu0 %v558
        %577 = vmatprep.subr.mxu0 0.0
        %578 = vmatpush1.msra.mxu0 %v559
        %579 = vmatprep.subr.mxu0 0.0
        %580 = vmatpush1.msra.mxu0 %v560
        %581 = vmatprep.subr.mxu0 0.0
        %582 = vmatpush1.msra.mxu0 %v561
        %583 = vmatprep.subr.mxu0 0.0
        %584 = vmatpush1.msra.mxu0 %v562
        %585 = vmatprep.subr.mxu0 0.0
        %586 = vmatpush1.msra.mxu0 %v563
        %587 = vmatprep.subr.mxu0 0.0
        %588 = vmatpush1.msra.mxu0 %v564
        %589 = vmatprep.subr.mxu0 0.0
        %590 = vmatpush1.msra.mxu0 %v565
        %591 = vmatprep.subr.mxu0 0.0
        %592 = vmatpush1.msra.mxu0 %v566
        %593 = vmatprep.subr.mxu0 0.0
        %594 = vmatpush1.msra.mxu0 %v567
        %595 = vmatprep.subr.mxu0 0.0
        %596 = vmatpush1.msra.mxu0 %v568
        %597 = vmatprep.subr.mxu0 0.0
        %598 = vmatpush1.msra.mxu0 %v569
        %599 = vmatprep.subr.mxu0 0.0
        %600 = vmatpush1.msra.mxu0 %v570
        %601 = vmatprep.subr.mxu0 0.0
        %602 = vmatpush1.msra.mxu0 %v571
        %603 = vmatprep.subr.mxu0 0.0
        %604 = vmatpush1.msra.mxu0 %v572
        %605 = vmatprep.subr.mxu0 0.0
        %606 = vmatpush1.msra.mxu0 0.0
        %607 = vmatprep.subr.mxu0 0.0
        %608 = vmatpush1.msra.mxu0 0.0
        %609 = vmatprep.subr.mxu0 0.0
        %610 = vmatpush1.msra.mxu0 0.0
        %611 = vmatprep.subr.mxu0 0.0
        %612 = vmatpush1.msra.mxu0 0.0
        %613 = vmatprep.subr.mxu0 0.0
        %614 = vmatpush1.msra.mxu0 0.0
        %615 = vmatprep.subr.mxu0 0.0
        %616 = vmatpush1.msra.mxu0 0.0
        %617 = vmatprep.subr.mxu0 0.0
        %618 = vmatpush1.msra.mxu0 0.0
        %619 = vmatprep.subr.mxu0 0.0
        %620 = vmatpush1.msra.mxu0 0.0
        %621 = vmatprep.subr.mxu0 0.0
        %622 = vmatpush1.msra.mxu0 0.0
        %623 = vmatprep.subr.mxu0 0.0
        %624 = vmatpush1.msra.mxu0 0.0
        %625 = vmatprep.subr.mxu0 0.0
        %626 = vmatpush1.msra.mxu0 0.0
        %627 = vmatprep.subr.mxu0 0.0
        %628 = vmatpush1.msra.mxu0 0.0
        %629 = vmatprep.subr.mxu0 0.0
        %630 = vmatpush1.msra.mxu0 0.0
        %631 = vmatprep.subr.mxu0 0.0
        %632 = vmatpush1.msra.mxu0 0.0
        %633 = vmatprep.subr.mxu0 0.0
        %634 = vmatpush1.msra.mxu0 0.0
        %635 = vmatprep.subr.mxu0 0.0
        %636 = vmatpush1.msra.mxu0 0.0
        %637 = vmatprep.mubr.f32.mxu0 0.0
        %638 = vmatmul.mubr.f32.gmra.mrb[0].mxu0 %v555
        %v639 = vpop.f32.mrb[0].mxu0
        %v640 = vadd.f32 0.0, %v639
        %v641 = vpop.f32.mrb[0].mxu0
        %642 = vdwg.mxu0
        %v643 = vadd.f32 %v556, %v640
        %644 = vst [vmem:[#allocation2] sm:$0xff] %v643
        %v645 = vld [vmem:[#allocation2] sm:$0xff]
        %v646 = vld [vmem:[%s4] sm:$0x1]
        %v648 = vlaneseq
        %v649 = vshrl.u32 %v648, 7
        %v650 = vsub.s32 0, %v649
        %v651 = vrot.slane %v646, %v650
        %v653 = vadd.f32 %v645, %v651
        %654 = vst [vmem:[%s268] sm:$0xff] %v653
        %s655 = sand.u32 %s141, 1
        %s656 = scalar_lea.sflag [#allocation5], %s655
        %s657 = sand.u32 %s141, 1
        %s658 = smul.addr %s657, 8
        %s659 = scalar_lea.vmem [#allocation9], %s658
        // Predicated region
        $region53: #{tpu_custom_call.1} parent=39 // pred_check
          %p660 = pneg %p151
        $region54: #{tpu_custom_call.1} parent=39 // pred_check_branch
          %662 = sbr.rel (%p660) target = $region56
        $region55: #{tpu_custom_call.1} parent=39 // pred_region
          %s664 = ssub.s32 128, 128
          %665 = vsyncadd %s656, %s664
          %s666 = smul.addr %s23, 128
          %s667 = scalar_lea.hbm %s5, %s666
          %s669 = sshll.u32 %s659, 4
          %s670 = int_to_ptr.vmem [resolvable:$true] %s669
          %672 = dma.vmem_to_hbm [thread:$0]  %s670, 128, %s667, %s656
        $region56: #{tpu_custom_call.1} parent=39 // pred_fallthru
          _
      $region40: #{tpu_custom_call.1} parent=5 // pred_fallthru
        _
      %p673 = scmp.le.s32.totalorder 2, %s18
      // Predicated region
      $region57: #{tpu_custom_call.1} parent=5 // pred_check
        %p674 = pneg %p673
      $region58: #{tpu_custom_call.1} parent=5 // pred_check_branch
        %676 = sbr.rel (%p674) target = $region60
      $region59: #{tpu_custom_call.1} parent=5 // pred_region
        %s677 = ssub.s32 %s18, 2
        // Predicated region
        $region61: #{tpu_custom_call.1} parent=59 // pred_check
          %p678 = pneg %p157
        $region62: #{tpu_custom_call.1} parent=59 // pred_check_branch
          %680 = sbr.rel (%p678) target = $region64
        $region63: #{tpu_custom_call.1} parent=59 // pred_region
          %s681 = sand.u32 %s142, 1
          %s682 = scalar_lea.sflag [#allocation5], %s681
          %s683 = sand.u32 %s142, 1
          %s684 = smul.addr %s683, 8
          %s685 = scalar_lea.vmem [#allocation9], %s684
          %686 = dma.done %s682, 128
        $region64: #{tpu_custom_call.1} parent=59 // pred_fallthru
          _
      $region60: #{tpu_custom_call.1} parent=5 // pred_fallthru
        _
    $region6: #{tpu_custom_call.1} parent=1 // loop_footer
      %s22 = sadd.s32 1, %s18
    $region7: #{tpu_custom_call.1} parent=1 // loop_footer_branch
      %17 = sbr.rel target = $region3
    $region8: #{tpu_custom_call.1} parent=1 // loop_exit
      _
    %687 = vsyncpa [#allocation4], 1
    %s688 = scalar_lea.sflag [#allocation4], 1
    %689 = vsyncpa %s688, 1
    %690 = vsyncpa [#allocation7], 1
    %691 = vsyncpa [#allocation5], 1
    %s692 = scalar_lea.sflag [#allocation5], 1
    %693 = vsyncpa %s692, 1

// kernel: tpu_custom_call.1
$region0: #{tpu_custom_call.1}
  #allocation0 [shape = 'u32[]', space=smem, size = 0x4, offset = 0x4, fixed_abs, tag = 'smem constant byte address 0x4 - core index']
  #allocation1 [shape = 'u32[144,128]{1,0:T(1,128)}', space=vmem, size = 0x12000, scoped, tag = 'internal scratch']
  #allocation2 [shape = 'f32[8,128]{1,0:T(8,128)}', space=vmem, size = 0x1000, scoped, tag = 'scratch operand']
  %s0 = inlined_call_operand.hbm [shape: f32[16,128], index: 0, kind: input, shape index: {}]
  %s1 = inlined_call_operand.hbm [shape: f32[128,256], index: 1, kind: input, shape index: {}]
  %s2 = inlined_call_operand.vmem [shape: f32[1,256], index: 2, kind: input, shape index: {}]
  %s3 = inlined_call_operand.hbm [shape: f32[256,128], index: 3, kind: input, shape index: {}]
  %s4 = inlined_call_operand.vmem [shape: f32[1,128], index: 4, kind: input, shape index: {}]
  %s5 = inlined_call_operand.hbm [shape: f32[16,128], index: 5, kind: output, shape index: {}]
  %s6 = sld [smem:[#allocation0]]
  $region65: #{tpu_custom_call.1} parent=0
    _
  %s8 = ssub.s32 1, %s6
  %s9 = scalar_select 0, %s8, %s6
  $region1: #{tpu_custom_call.1} parent=0
    #allocation3 [shape = 'u8[8192]{0}', space=vmem, size = 0x2000, scoped, tag = 'input window, operand 0']
    #allocation4 [shape = 's32[2]{0}', space=sflag, size = 0x8, scoped, tag = 'scoped memory for tpu_custom_call.1']
    #allocation5 [shape = 's32[2]{0}', space=sflag, size = 0x8, scoped, tag = 'scoped memory for tpu_custom_call.1']
    #allocation6 [shape = 'u8[131072]{0}', space=vmem, size = 0x20000, scoped, tag = 'input window, operand 1, single buffered']
    #allocation7 [shape = 's32[1]{0}', space=sflag, size = 0x4, scoped, tag = 'scoped memory for tpu_custom_call.1']
    #allocation8 [shape = 'u8[131072]{0}', space=vmem, size = 0x20000, scoped, tag = 'input window, operand 3, single buffered']
    #allocation9 [shape = 'u8[8192]{0}', space=vmem, size = 0x2000, scoped, tag = 'output window, operand 0']
    %10 = vsyncpa [#allocation4], 0
    %s11 = scalar_lea.sflag [#allocation4], 1
    %12 = vsyncpa %s11, 0
    %13 = vsyncpa [#allocation7], 0
    %14 = vsyncpa [#allocation5], 0
    %s15 = scalar_lea.sflag [#allocation5], 1
    %16 = vsyncpa %s15, 0
    loop: start=0, step=1, limit=4
    $region2: #{tpu_custom_call.1} parent=1 // loop_pre_header
      _
    $region3: #{tpu_custom_call.1} parent=1 // loop_header
      %s18 = sphi 0, %s22
      %p19 = scmp.ge.s32.totalorder %s18, 4
      %s28 = sphi 0, %s30
      %s31 = sphi 0, %s28
      %s32 = sphi 0, %s31
      %s48 = sphi 0, %s32
      %s52 = sphi 0, %s52
      %s54 = sphi 0, %s52
      %s55 = sphi 0, %s54
      %s69 = sphi 0, %s55
      %s73 = sphi 0, %s73
      %s75 = sphi 0, %s73
      %s76 = sphi 0, %s75
      %s90 = sphi 0, %s76
      %s94 = sphi 0, %s94
      %s96 = sphi 0, %s94
      %s97 = sphi 0, %s96
      %s111 = sphi 0, %s97
      %s115 = sphi 0, %s115
      %s117 = sphi 0, %s115
      %s118 = sphi 0, %s117
      %s132 = sphi 0, %s118
      %s138 = sphi 0, %s140
      %s141 = sphi 0, %s138
      %s142 = sphi 0, %s141
      %s158 = sphi 0, %s142
    $region4: #{tpu_custom_call.1} parent=1 // loop_header_branch
      %21 = sbr.rel (%p19) target = $region8
    $region5: #{tpu_custom_call.1} parent=1 // loop_body
      %s23 = ssub.s32 %s18, 1
      %s24 = ssub.s32 %s18, 2
      %s25 = sadd.s32 %s18, 1
      %s26 = ssub.s32 %s18, %s25
      %p27 = scmp.eq.s32.totalorder %s26, 0
      %s29 = sadd.s32 %s28, 1
      %s30 = scalar_select %p27, %s28, %s29
      %p33 = pneg %p27
      %p34 = scmp.eq.s32.totalorder %s18, 1
      %p35 = por %p33, %p34
      %p36 = scmp.ne.s32.totalorder %s28, %s31
      %p37 = scmp.eq.s32.totalorder %s18, 0
      %p38 = por %p36, %p37
      %p39 = scmp.ne.s32.totalorder %s28, %s31
      %p40 = scmp.eq.s32.totalorder %s23, 1
      %p41 = por %p39, %p40
      %p42 = scmp.ne.s32.totalorder %s31, %s32
      %p43 = scmp.eq.s32.totalorder %s23, 0
      %p44 = por %p42, %p43
      %p45 = scmp.ne.s32.totalorder %s31, %s32
      %p46 = scmp.eq.s32.totalorder %s24, 1
      %p47 = por %p45, %p46
      %p49 = scmp.ne.s32.totalorder %s32, %s48
      %p50 = scmp.eq.s32.totalorder %s24, 0
      %p51 = por %p49, %p50
      %s53 = sadd.s32 %s52, 1
      %p56 = scmp.eq.s32.totalorder %s18, 1
      %p57 = scmp.ne.s32.totalorder %s52, %s54
      %p58 = scmp.eq.s32.totalorder %s18, 0
      %p59 = por %p57, %p58
      %p60 = scmp.ne.s32.totalorder %s52, %s54
      %p61 = scmp.eq.s32.totalorder %s23, 1
      %p62 = por %p60, %p61
      %p63 = scmp.ne.s32.totalorder %s54, %s55
      %p64 = scmp.eq.s32.totalorder %s23, 0
      %p65 = por %p63, %p64
      %p66 = scmp.ne.s32.totalorder %s54, %s55
      %p67 = scmp.eq.s32.totalorder %s24, 1
      %p68 = por %p66, %p67
      %p70 = scmp.ne.s32.totalorder %s55, %s69
      %p71 = scmp.eq.s32.totalorder %s24, 0
      %p72 = por %p70, %p71
      %s74 = sadd.s32 %s73, 1
      %p77 = scmp.eq.s32.totalorder %s18, 1
      %p78 = scmp.ne.s32.totalorder %s73, %s75
      %p79 = scmp.eq.s32.totalorder %s18, 0
      %p80 = por %p78, %p79
      %p81 = scmp.ne.s32.totalorder %s73, %s75
      %p82 = scmp.eq.s32.totalorder %s23, 1
      %p83 = por %p81, %p82
      %p84 = scmp.ne.s32.totalorder %s75, %s76
      %p85 = scmp.eq.s32.totalorder %s23, 0
      %p86 = por %p84, %p85
      %p87 = scmp.ne.s32.totalorder %s75, %s76
      %p88 = scmp.eq.s32.totalorder %s24, 1
      %p89 = por %p87, %p88
      %p91 = scmp.ne.s32.totalorder %s76, %s90
      %p92 = scmp.eq.s32.totalorder %s24, 0
      %p93 = por %p91, %p92
      %s95 = sadd.s32 %s94, 1
      %p98 = scmp.eq.s32.totalorder %s18, 1
      %p99 = scmp.ne.s32.totalorder %s94, %s96
      %p100 = scmp.eq.s32.totalorder %s18, 0
      %p101 = por %p99, %p100
      %p102 = scmp.ne.s32.totalorder %s94, %s96
      %p103 = scmp.eq.s32.totalorder %s23, 1
      %p104 = por %p102, %p103
      %p105 = scmp.ne.s32.totalorder %s96, %s97
      %p106 = scmp.eq.s32.totalorder %s23, 0
      %p107 = por %p105, %p106
      %p108 = scmp.ne.s32.totalorder %s96, %s97
      %p109 = scmp.eq.s32.totalorder %s24, 1
      %p110 = por %p108, %p109
      %p112 = scmp.ne.s32.totalorder %s97, %s111
      %p113 = scmp.eq.s32.totalorder %s24, 0
      %p114 = por %p112, %p113
      %s116 = sadd.s32 %s115, 1
      %p119 = scmp.eq.s32.totalorder %s18, 1
      %p120 = scmp.ne.s32.totalorder %s115, %s117
      %p121 = scmp.eq.s32.totalorder %s18, 0
      %p122 = por %p120, %p121
      %p123 = scmp.ne.s32.totalorder %s115, %s117
      %p124 = scmp.eq.s32.totalorder %s23, 1
      %p125 = por %p123, %p124
      %p126 = scmp.ne.s32.totalorder %s117, %s118
      %p127 = scmp.eq.s32.totalorder %s23, 0
      %p128 = por %p126, %p127
      %p129 = scmp.ne.s32.totalorder %s117, %s118
      %p130 = scmp.eq.s32.totalorder %s24, 1
      %p131 = por %p129, %p130
      %p133 = scmp.ne.s32.totalorder %s118, %s132
      %p134 = scmp.eq.s32.totalorder %s24, 0
      %p135 = por %p133, %p134
      %s136 = ssub.s32 %s18, %s25
      %p137 = scmp.eq.s32.totalorder %s136, 0
      %s139 = sadd.s32 %s138, 1
      %s140 = scalar_select %p137, %s138, %s139
      %p143 = pneg %p137
      %p144 = scmp.eq.s32.totalorder %s18, 1
      %p145 = por %p143, %p144
      %p146 = scmp.ne.s32.totalorder %s138, %s141
      %p147 = scmp.eq.s32.totalorder %s18, 0
      %p148 = por %p146, %p147
      %p149 = scmp.ne.s32.totalorder %s138, %s141
      %p150 = scmp.eq.s32.totalorder %s23, 1
      %p151 = por %p149, %p150
      %p152 = scmp.ne.s32.totalorder %s141, %s142
      %p153 = scmp.eq.s32.totalorder %s23, 0
      %p154 = por %p152, %p153
      %p155 = scmp.ne.s32.totalorder %s141, %s142
      %p156 = scmp.eq.s32.totalorder %s24, 1
      %p157 = por %p155, %p156
      %p159 = scmp.ne.s32.totalorder %s142, %s158
      %p160 = scmp.eq.s32.totalorder %s24, 0
      %p161 = por %p159, %p160
      %p162 = scmp.le.s32.totalorder 1, %s18
      %p163 = scmp.lt.s32.totalorder %s18, 3
      %p164 = pnand %p162, %p163
      %p165 = pneg %p164
      // Predicated region
      $region9: #{tpu_custom_call.1} parent=5 // pred_check
        _
      $region10: #{tpu_custom_call.1} parent=5 // pred_check_branch
        %167 = sbr.rel (%p164) target = $region12
      $region11: #{tpu_custom_call.1} parent=5 // pred_region
        %s168 = ssub.s32 %s18, 1
        // Predicated region
        $region13: #{tpu_custom_call.1} parent=11 // pred_check
          %p169 = pneg %p65
        $region14: #{tpu_custom_call.1} parent=11 // pred_check_branch
          %171 = sbr.rel (%p169) target = $region16
        $region15: #{tpu_custom_call.1} parent=11 // pred_region
          %s173 = ssub.s32 4096, 4096
          %174 = vsyncadd [#allocation7], %s173
          %s175 = sshll.u32 [#allocation6], 4
          %s176 = int_to_ptr.vmem [resolvable:$true] %s175
          %181 = dma.hbm_to_vmem [thread:$0]  %s1, 4096, %s176, [#allocation7], 256, 256, 16
        $region16: #{tpu_custom_call.1} parent=11 // pred_fallthru
          _
        // Predicated region
        $region17: #{tpu_custom_call.1} parent=11 // pred_check
          %p182 = pneg %p86
        $region18: #{tpu_custom_call.1} parent=11 // pred_check_branch
          %184 = sbr.rel (%p182) target = $region20
        $region19: #{tpu_custom_call.1} parent=11 // pred_region
          _
        $region20: #{tpu_custom_call.1} parent=11 // pred_fallthru
          _
        // Predicated region
        $region21: #{tpu_custom_call.1} parent=11 // pred_check
          %p185 = pneg %p107
        $region22: #{tpu_custom_call.1} parent=11 // pred_check_branch
          %187 = sbr.rel (%p185) target = $region24
        $region23: #{tpu_custom_call.1} parent=11 // pred_region
          %s189 = ssub.s32 4096, 4096
          %190 = vsyncadd [#allocation7], %s189
          %s191 = sshll.u32 [#allocation8], 4
          %s192 = int_to_ptr.vmem [resolvable:$true] %s191
          %197 = dma.hbm_to_vmem [thread:$0]  %s3, 4096, %s192, [#allocation7], 128, 128, 8
        $region24: #{tpu_custom_call.1} parent=11 // pred_fallthru
          _
        // Predicated region
        $region25: #{tpu_custom_call.1} parent=11 // pred_check
          %p198 = pneg %p128
        $region26: #{tpu_custom_call.1} parent=11 // pred_check_branch
          %200 = sbr.rel (%p198) target = $region28
        $region27: #{tpu_custom_call.1} parent=11 // pred_region
          _
        $region28: #{tpu_custom_call.1} parent=11 // pred_fallthru
          _
      $region12: #{tpu_custom_call.1} parent=5 // pred_fallthru
        _
      %p201 = scmp.lt.s32.totalorder %s18, 2
      // Predicated region
      $region29: #{tpu_custom_call.1} parent=5 // pred_check
        %p202 = pneg %p201
      $region30: #{tpu_custom_call.1} parent=5 // pred_check_branch
        %204 = sbr.rel (%p202) target = $region32
      $region31: #{tpu_custom_call.1} parent=5 // pred_region
        // Predicated region
        $region33: #{tpu_custom_call.1} parent=31 // pred_check
          %p205 = pneg %p38
        $region34: #{tpu_custom_call.1} parent=31 // pred_check_branch
          %207 = sbr.rel (%p205) target = $region36
        $region35: #{tpu_custom_call.1} parent=31 // pred_region
          %s208 = sand.u32 %s28, 1
          %s209 = scalar_lea.sflag [#allocation4], %s208
          %s210 = sand.u32 %s28, 1
          %s211 = smul.addr %s210, 8
          %s212 = scalar_lea.vmem [#allocation3], %s211
          %s214 = ssub.s32 128, 128
          %215 = vsyncadd %s209, %s214
          %s216 = smul.addr %s18, 128
          %s217 = scalar_lea.hbm %s0, %s216
          %s219 = sshll.u32 %s212, 4
          %s220 = int_to_ptr.vmem [resolvable:$true] %s219
          %222 = dma.hbm_to_vmem [thread:$0]  %s217, 128, %s220, %s209
        $region36: #{tpu_custom_call.1} parent=31 // pred_fallthru
          _
      $region32: #{tpu_custom_call.1} parent=5 // pred_fallthru
        _
      %p223 = scmp.le.s32.totalorder 1, %s18
      %p224 = scmp.lt.s32.totalorder %s18, 3
      %p225 = pnand %p223, %p224
      %p226 = pneg %p225
      // Predicated region
      $region37: #{tpu_custom_call.1} parent=5 // pred_check
        _
      $region38: #{tpu_custom_call.1} parent=5 // pred_check_branch
        %228 = sbr.rel (%p225) target = $region40
      $region39: #{tpu_custom_call.1} parent=5 // pred_region
        %s229 = ssub.s32 %s18, 1
        %s230 = sand.u32 %s31, 1
        %s231 = scalar_lea.sflag [#allocation4], %s230
        %s232 = sand.u32 %s31, 1
        %s233 = smul.addr %s232, 8
        %s234 = scalar_lea.vmem [#allocation3], %s233
        // Predicated region
        $region41: #{tpu_custom_call.1} parent=39 // pred_check
          %p235 = pneg %p44
        $region42: #{tpu_custom_call.1} parent=39 // pred_check_branch
          %237 = sbr.rel (%p235) target = $region44
        $region43: #{tpu_custom_call.1} parent=39 // pred_region
          %238 = dma.done %s231, 128
        $region44: #{tpu_custom_call.1} parent=39 // pred_fallthru
          _
        // Predicated region
        $region45: #{tpu_custom_call.1} parent=39 // pred_check
          %p239 = pneg %p65
        $region46: #{tpu_custom_call.1} parent=39 // pred_check_branch
          %241 = sbr.rel (%p239) target = $region48
        $region47: #{tpu_custom_call.1} parent=39 // pred_region
          %242 = dma.done [#allocation7], 4096
        $region48: #{tpu_custom_call.1} parent=39 // pred_fallthru
          _
        // Predicated region
        $region49: #{tpu_custom_call.1} parent=39 // pred_check
          %p243 = pneg %p107
        $region50: #{tpu_custom_call.1} parent=39 // pred_check_branch
          %245 = sbr.rel (%p243) target = $region52
        $region51: #{tpu_custom_call.1} parent=39 // pred_region
          %246 = dma.done [#allocation7], 4096
        $region52: #{tpu_custom_call.1} parent=39 // pred_fallthru
          _
        %s247 = sand.u32 %s31, 1
        %s248 = scalar_lea.sflag [#allocation4], %s247
        %s249 = sand.u32 %s31, 1
        %s250 = smul.addr %s249, 8
        %s251 = scalar_lea.vmem [#allocation3], %s250
        %p252 = pneg %p44
        %p253 = pneg %p41
        %p254 = pneg %p65
        %p255 = pneg %p62
        %p256 = pneg %p86
        %p257 = pneg %p83
        %p258 = pneg %p107
        %p259 = pneg %p104
        %p260 = pneg %p128
        %p261 = pneg %p125
        %p262 = pneg %p154
        %p263 = pneg %p151
        %s264 = sand.u32 %s141, 1
        %s265 = scalar_lea.sflag [#allocation5], %s264
        %s266 = sand.u32 %s141, 1
        %s267 = smul.addr %s266, 8
        %s268 = scalar_lea.vmem [#allocation9], %s267
        %v269 = vld [vmem:[%s234] sm:$0xff]
        %270 = vst [vmem:[#allocation2] sm:$0xff] 0.0
        %v271 = vld [vmem:[#allocation6] sm:$0xff]
        %v272 = vld [vmem:[#allocation6 + $0x10] sm:$0xff]
        %v273 = vld [vmem:[#allocation6 + $0x20] sm:$0xff]
        %v274 = vld [vmem:[#allocation6 + $0x30] sm:$0xff]
        %v275 = vld [vmem:[#allocation6 + $0x40] sm:$0xff]
        %v276 = vld [vmem:[#allocation6 + $0x50] sm:$0xff]
        %v277 = vld [vmem:[#allocation6 + $0x60] sm:$0xff]
        %v278 = vld [vmem:[#allocation6 + $0x70] sm:$0xff]
        %v279 = vld [vmem:[#allocation6 + $0x80] sm:$0xff]
        %v280 = vld [vmem:[#allocation6 + $0x90] sm:$0xff]
        %v281 = vld [vmem:[#allocation6 + $0xa0] sm:$0xff]
        %v282 = vld [vmem:[#allocation6 + $0xb0] sm:$0xff]
        %v283 = vld [vmem:[#allocation6 + $0xc0] sm:$0xff]
        %v284 = vld [vmem:[#allocation6 + $0xd0] sm:$0xff]
        %v285 = vld [vmem:[#allocation6 + $0xe0] sm:$0xff]
        %v286 = vld [vmem:[#allocation6 + $0xf0] sm:$0xff]
        %v287 = vld [vmem:[%s2] sm:$0x1]
        %v289 = vlaneseq
        %v290 = vshrl.u32 %v289, 7
        %v291 = vsub.s32 0, %v290
        %v292 = vrot.slane %v287, %v291
        %294 = vmatprep.subr.mxu0 0.0
        %295 = vmatpush1.msra.mxu0 %v271
        %296 = vmatprep.subr.mxu0 0.0
        %297 = vmatpush1.msra.mxu0 %v272
        %298 = vmatprep.subr.mxu0 0.0
        %299 = vmatpush1.msra.mxu0 %v273
        %300 = vmatprep.subr.mxu0 0.0
        %301 = vmatpush1.msra.mxu0 %v274
        %302 = vmatprep.subr.mxu0 0.0
        %303 = vmatpush1.msra.mxu0 %v275
        %304 = vmatprep.subr.mxu0 0.0
        %305 = vmatpush1.msra.mxu0 %v276
        %306 = vmatprep.subr.mxu0 0.0
        %307 = vmatpush1.msra.mxu0 %v277
        %308 = vmatprep.subr.mxu0 0.0
        %309 = vmatpush1.msra.mxu0 %v278
        %310 = vmatprep.subr.mxu0 0.0
        %311 = vmatpush1.msra.mxu0 %v279
        %312 = vmatprep.subr.mxu0 0.0
        %313 = vmatpush1.msra.mxu0 %v280
        %314 = vmatprep.subr.mxu0 0.0
        %315 = vmatpush1.msra.mxu0 %v281
        %316 = vmatprep.subr.mxu0 0.0
        %317 = vmatpush1.msra.mxu0 %v282
        %318 = vmatprep.subr.mxu0 0.0
        %319 = vmatpush1.msra.mxu0 %v283
        %320 = vmatprep.subr.mxu0 0.0
        %321 = vmatpush1.msra.mxu0 %v284
        %322 = vmatprep.subr.mxu0 0.0
        %323 = vmatpush1.msra.mxu0 %v285
        %324 = vmatprep.subr.mxu0 0.0
        %325 = vmatpush1.msra.mxu0 %v286
        %326 = vmatprep.subr.mxu0 0.0
        %327 = vmatpush1.msra.mxu0 0.0
        %328 = vmatprep.subr.mxu0 0.0
        %329 = vmatpush1.msra.mxu0 0.0
        %330 = vmatprep.subr.mxu0 0.0
        %331 = vmatpush1.msra.mxu0 0.0
        %332 = vmatprep.subr.mxu0 0.0
        %333 = vmatpush1.msra.mxu0 0.0
        %334 = vmatprep.subr.mxu0 0.0
        %335 = vmatpush1.msra.mxu0 0.0
        %336 = vmatprep.subr.mxu0 0.0
        %337 = vmatpush1.msra.mxu0 0.0
        %338 = vmatprep.subr.mxu0 0.0
        %339 = vmatpush1.msra.mxu0 0.0
        %340 = vmatprep.subr.mxu0 0.0
        %341 = vmatpush1.msra.mxu0 0.0
        %342 = vmatprep.subr.mxu0 0.0
        %343 = vmatpush1.msra.mxu0 0.0
        %344 = vmatprep.subr.mxu0 0.0
        %345 = vmatpush1.msra.mxu0 0.0
        %346 = vmatprep.subr.mxu0 0.0
        %347 = vmatpush1.msra.mxu0 0.0
        %348 = vmatprep.subr.mxu0 0.0
        %349 = vmatpush1.msra.mxu0 0.0
        %350 = vmatprep.subr.mxu0 0.0
        %351 = vmatpush1.msra.mxu0 0.0
        %352 = vmatprep.subr.mxu0 0.0
        %353 = vmatpush1.msra.mxu0 0.0
        %354 = vmatprep.subr.mxu0 0.0
        %355 = vmatpush1.msra.mxu0 0.0
        %356 = vmatprep.subr.mxu0 0.0
        %357 = vmatpush1.msra.mxu0 0.0
        %358 = vmatprep.mubr.f32.mxu0 0.0
        %359 = vmatmul.mubr.f32.gmra.mrb[0].mxu0 %v269
        %v360 = vpop.f32.mrb[0].mxu0
        %v361 = vadd.f32 %v292, %v360
        %v362 = vpop.f32.mrb[0].mxu0
        %363 = vdwg.mxu0
        %v364 = vmul.f32 %v361, 0.5
        %v365 = vmul.f32 %v361, 0.70710677
        %v366 = verf.f32.pop %v365
        %v367 = vadd.f32 %v366, 1.0
        %v368 = vmul.f32 %v364, %v367
        %v369 = vld [vmem:[#allocation2] sm:$0xff]
        %v370 = vld [vmem:[#allocation8] sm:$0xff]
        %v371 = vld [vmem:[#allocation8 + $0x8] sm:$0xff]
        %v372 = vld [vmem:[#allocation8 + $0x10] sm:$0xff]
        %v373 = vld [vmem:[#allocation8 + $0x18] sm:$0xff]
        %v374 = vld [vmem:[#allocation8 + $0x20] sm:$0xff]
        %v375 = vld [vmem:[#allocation8 + $0x28] sm:$0xff]
        %v376 = vld [vmem:[#allocation8 + $0x30] sm:$0xff]
        %v377 = vld [vmem:[#allocation8 + $0x38] sm:$0xff]
        %v378 = vld [vmem:[#allocation8 + $0x40] sm:$0xff]
        %v379 = vld [vmem:[#allocation8 + $0x48] sm:$0xff]
        %v380 = vld [vmem:[#allocation8 + $0x50] sm:$0xff]
        %v381 = vld [vmem:[#allocation8 + $0x58] sm:$0xff]
        %v382 = vld [vmem:[#allocation8 + $0x60] sm:$0xff]
        %v383 = vld [vmem:[#allocation8 + $0x68] sm:$0xff]
        %v384 = vld [vmem:[#allocation8 + $0x70] sm:$0xff]
        %v385 = vld [vmem:[#allocation8 + $0x78] sm:$0xff]
        %386 = vmatprep.subr.mxu0 0.0
        %387 = vmatpush1.msra.mxu0 %v370
        %388 = vmatprep.subr.mxu0 0.0
        %389 = vmatpush1.msra.mxu0 %v371
        %390 = vmatprep.subr.mxu0 0.0
        %391 = vmatpush1.msra.mxu0 %v372
        %392 = vmatprep.subr.mxu0 0.0
        %393 = vmatpush1.msra.mxu0 %v373
        %394 = vmatprep.subr.mxu0 0.0
        %395 = vmatpush1.msra.mxu0 %v374
        %396 = vmatprep.subr.mxu0 0.0
        %397 = vmatpush1.msra.mxu0 %v375
        %398 = vmatprep.subr.mxu0 0.0
        %399 = vmatpush1.msra.mxu0 %v376
        %400 = vmatprep.subr.mxu0 0.0
        %401 = vmatpush1.msra.mxu0 %v377
        %402 = vmatprep.subr.mxu0 0.0
        %403 = vmatpush1.msra.mxu0 %v378
        %404 = vmatprep.subr.mxu0 0.0
        %405 = vmatpush1.msra.mxu0 %v379
        %406 = vmatprep.subr.mxu0 0.0
        %407 = vmatpush1.msra.mxu0 %v380
        %408 = vmatprep.subr.mxu0 0.0
        %409 = vmatpush1.msra.mxu0 %v381
        %410 = vmatprep.subr.mxu0 0.0
        %411 = vmatpush1.msra.mxu0 %v382
        %412 = vmatprep.subr.mxu0 0.0
        %413 = vmatpush1.msra.mxu0 %v383
        %414 = vmatprep.subr.mxu0 0.0
        %415 = vmatpush1.msra.mxu0 %v384
        %416 = vmatprep.subr.mxu0 0.0
        %417 = vmatpush1.msra.mxu0 %v385
        %418 = vmatprep.subr.mxu0 0.0
        %419 = vmatpush1.msra.mxu0 0.0
        %420 = vmatprep.subr.mxu0 0.0
        %421 = vmatpush1.msra.mxu0 0.0
        %422 = vmatprep.subr.mxu0 0.0
        %423 = vmatpush1.msra.mxu0 0.0
        %424 = vmatprep.subr.mxu0 0.0
        %425 = vmatpush1.msra.mxu0 0.0
        %426 = vmatprep.subr.mxu0 0.0
        %427 = vmatpush1.msra.mxu0 0.0
        %428 = vmatprep.subr.mxu0 0.0
        %429 = vmatpush1.msra.mxu0 0.0
        %430 = vmatprep.subr.mxu0 0.0
        %431 = vmatpush1.msra.mxu0 0.0
        %432 = vmatprep.subr.mxu0 0.0
        %433 = vmatpush1.msra.mxu0 0.0
        %434 = vmatprep.subr.mxu0 0.0
        %435 = vmatpush1.msra.mxu0 0.0
        %436 = vmatprep.subr.mxu0 0.0
        %437 = vmatpush1.msra.mxu0 0.0
        %438 = vmatprep.subr.mxu0 0.0
        %439 = vmatpush1.msra.mxu0 0.0
        %440 = vmatprep.subr.mxu0 0.0
        %441 = vmatpush1.msra.mxu0 0.0
        %442 = vmatprep.subr.mxu0 0.0
        %443 = vmatpush1.msra.mxu0 0.0
        %444 = vmatprep.subr.mxu0 0.0
        %445 = vmatpush1.msra.mxu0 0.0
        %446 = vmatprep.subr.mxu0 0.0
        %447 = vmatpush1.msra.mxu0 0.0
        %448 = vmatprep.subr.mxu0 0.0
        %449 = vmatpush1.msra.mxu0 0.0
        %450 = vmatprep.mubr.f32.mxu0 0.0
        %451 = vmatmul.mubr.f32.gmra.mrb[0].mxu0 %v368
        %v452 = vpop.f32.mrb[0].mxu0
        %v453 = vadd.f32 0.0, %v452
        %v454 = vpop.f32.mrb[0].mxu0
        %455 = vdwg.mxu0
        %v456 = vadd.f32 %v369, %v453
        %457 = vst [vmem:[#allocation2] sm:$0xff] %v456
        %v458 = vld [vmem:[#allocation6 + $0x8] sm:$0xff]
        %v459 = vld [vmem:[#allocation6 + $0x18] sm:$0xff]
        %v460 = vld [vmem:[#allocation6 + $0x28] sm:$0xff]
        %v461 = vld [vmem:[#allocation6 + $0x38] sm:$0xff]
        %v462 = vld [vmem:[#allocation6 + $0x48] sm:$0xff]
        %v463 = vld [vmem:[#allocation6 + $0x58] sm:$0xff]
        %v464 = vld [vmem:[#allocation6 + $0x68] sm:$0xff]
        %v465 = vld [vmem:[#allocation6 + $0x78] sm:$0xff]
        %v466 = vld [vmem:[#allocation6 + $0x88] sm:$0xff]
        %v467 = vld [vmem:[#allocation6 + $0x98] sm:$0xff]
        %v468 = vld [vmem:[#allocation6 + $0xa8] sm:$0xff]
        %v469 = vld [vmem:[#allocation6 + $0xb8] sm:$0xff]
        %v470 = vld [vmem:[#allocation6 + $0xc8] sm:$0xff]
        %v471 = vld [vmem:[#allocation6 + $0xd8] sm:$0xff]
        %v472 = vld [vmem:[#allocation6 + $0xe8] sm:$0xff]
        %v473 = vld [vmem:[#allocation6 + $0xf8] sm:$0xff]
        %v474 = vld [vmem:[%s2 + $0x1] sm:$0x1]
        %v476 = vlaneseq
        %v477 = vshrl.u32 %v476, 7
        %v478 = vsub.s32 0, %v477
        %v479 = vrot.slane %v474, %v478
        %481 = vmatprep.subr.mxu0 0.0
        %482 = vmatpush1.msra.mxu0 %v458
        %483 = vmatprep.subr.mxu0 0.0
        %484 = vmatpush1.msra.mxu0 %v459
        %485 = vmatprep.subr.mxu0 0.0
        %486 = vmatpush1.msra.mxu0 %v460
        %487 = vmatprep.subr.mxu0 0.0
        %488 = vmatpush1.msra.mxu0 %v461
        %489 = vmatprep.subr.mxu0 0.0
        %490 = vmatpush1.msra.mxu0 %v462
        %491 = vmatprep.subr.mxu0 0.0
        %492 = vmatpush1.msra.mxu0 %v463
        %493 = vmatprep.subr.mxu0 0.0
        %494 = vmatpush1.msra.mxu0 %v464
        %495 = vmatprep.subr.mxu0 0.0
        %496 = vmatpush1.msra.mxu0 %v465
        %497 = vmatprep.subr.mxu0 0.0
        %498 = vmatpush1.msra.mxu0 %v466
        %499 = vmatprep.subr.mxu0 0.0
        %500 = vmatpush1.msra.mxu0 %v467
        %501 = vmatprep.subr.mxu0 0.0
        %502 = vmatpush1.msra.mxu0 %v468
        %503 = vmatprep.subr.mxu0 0.0
        %504 = vmatpush1.msra.mxu0 %v469
        %505 = vmatprep.subr.mxu0 0.0
        %506 = vmatpush1.msra.mxu0 %v470
        %507 = vmatprep.subr.mxu0 0.0
        %508 = vmatpush1.msra.mxu0 %v471
        %509 = vmatprep.subr.mxu0 0.0
        %510 = vmatpush1.msra.mxu0 %v472
        %511 = vmatprep.subr.mxu0 0.0
        %512 = vmatpush1.msra.mxu0 %v473
        %513 = vmatprep.subr.mxu0 0.0
        %514 = vmatpush1.msra.mxu0 0.0
        %515 = vmatprep.subr.mxu0 0.0
        %516 = vmatpush1.msra.mxu0 0.0
        %517 = vmatprep.subr.mxu0 0.0
        %518 = vmatpush1.msra.mxu0 0.0
        %519 = vmatprep.subr.mxu0 0.0
        %520 = vmatpush1.msra.mxu0 0.0
        %521 = vmatprep.subr.mxu0 0.0
        %522 = vmatpush1.msra.mxu0 0.0
        %523 = vmatprep.subr.mxu0 0.0
        %524 = vmatpush1.msra.mxu0 0.0
        %525 = vmatprep.subr.mxu0 0.0
        %526 = vmatpush1.msra.mxu0 0.0
        %527 = vmatprep.subr.mxu0 0.0
        %528 = vmatpush1.msra.mxu0 0.0
        %529 = vmatprep.subr.mxu0 0.0
        %530 = vmatpush1.msra.mxu0 0.0
        %531 = vmatprep.subr.mxu0 0.0
        %532 = vmatpush1.msra.mxu0 0.0
        %533 = vmatprep.subr.mxu0 0.0
        %534 = vmatpush1.msra.mxu0 0.0
        %535 = vmatprep.subr.mxu0 0.0
        %536 = vmatpush1.msra.mxu0 0.0
        %537 = vmatprep.subr.mxu0 0.0
        %538 = vmatpush1.msra.mxu0 0.0
        %539 = vmatprep.subr.mxu0 0.0
        %540 = vmatpush1.msra.mxu0 0.0
        %541 = vmatprep.subr.mxu0 0.0
        %542 = vmatpush1.msra.mxu0 0.0
        %543 = vmatprep.subr.mxu0 0.0
        %544 = vmatpush1.msra.mxu0 0.0
        %545 = vmatprep.mubr.f32.mxu0 0.0
        %546 = vmatmul.mubr.f32.gmra.mrb[0].mxu0 %v269
        %v547 = vpop.f32.mrb[0].mxu0
        %v548 = vadd.f32 %v479, %v547
        %v549 = vpop.f32.mrb[0].mxu0
        %550 = vdwg.mxu0
        %v551 = vmul.f32 %v548, 0.5
        %v552 = vmul.f32 %v548, 0.70710677
        %v553 = verf.f32.pop %v552
        %v554 = vadd.f32 %v553, 1.0
        %v555 = vmul.f32 %v551, %v554
        %v556 = vld [vmem:[#allocation2] sm:$0xff]
        %v557 = vld [vmem:[#allocation8 + $0x80] sm:$0xff]
        %v558 = vld [vmem:[#allocation8 + $0x88] sm:$0xff]
        %v559 = vld [vmem:[#allocation8 + $0x90] sm:$0xff]
        %v560 = vld [vmem:[#allocation8 + $0x98] sm:$0xff]
        %v561 = vld [vmem:[#allocation8 + $0xa0] sm:$0xff]
        %v562 = vld [vmem:[#allocation8 + $0xa8] sm:$0xff]
        %v563 = vld [vmem:[#allocation8 + $0xb0] sm:$0xff]
        %v564 = vld [vmem:[#allocation8 + $0xb8] sm:$0xff]
        %v565 = vld [vmem:[#allocation8 + $0xc0] sm:$0xff]
        %v566 = vld [vmem:[#allocation8 + $0xc8] sm:$0xff]
        %v567 = vld [vmem:[#allocation8 + $0xd0] sm:$0xff]
        %v568 = vld [vmem:[#allocation8 + $0xd8] sm:$0xff]
        %v569 = vld [vmem:[#allocation8 + $0xe0] sm:$0xff]
        %v570 = vld [vmem:[#allocation8 + $0xe8] sm:$0xff]
        %v571 = vld [vmem:[#allocation8 + $0xf0] sm:$0xff]
        %v572 = vld [vmem:[#allocation8 + $0xf8] sm:$0xff]
        %573 = vmatprep.subr.mxu0 0.0
        %574 = vmatpush1.msra.mxu0 %v557
        %575 = vmatprep.subr.mxu0 0.0
        %576 = vmatpush1.msra.mxu0 %v558
        %577 = vmatprep.subr.mxu0 0.0
        %578 = vmatpush1.msra.mxu0 %v559
        %579 = vmatprep.subr.mxu0 0.0
        %580 = vmatpush1.msra.mxu0 %v560
        %581 = vmatprep.subr.mxu0 0.0
        %582 = vmatpush1.msra.mxu0 %v561
        %583 = vmatprep.subr.mxu0 0.0
        %584 = vmatpush1.msra.mxu0 %v562
        %585 = vmatprep.subr.mxu0 0.0
        %586 = vmatpush1.msra.mxu0 %v563
        %587 = vmatprep.subr.mxu0 0.0
        %588 = vmatpush1.msra.mxu0 %v564
        %589 = vmatprep.subr.mxu0 0.0
        %590 = vmatpush1.msra.mxu0 %v565
        %591 = vmatprep.subr.mxu0 0.0
        %592 = vmatpush1.msra.mxu0 %v566
        %593 = vmatprep.subr.mxu0 0.0
        %594 = vmatpush1.msra.mxu0 %v567
        %595 = vmatprep.subr.mxu0 0.0
        %596 = vmatpush1.msra.mxu0 %v568
        %597 = vmatprep.subr.mxu0 0.0
        %598 = vmatpush1.msra.mxu0 %v569
        %599 = vmatprep.subr.mxu0 0.0
        %600 = vmatpush1.msra.mxu0 %v570
        %601 = vmatprep.subr.mxu0 0.0
        %602 = vmatpush1.msra.mxu0 %v571
        %603 = vmatprep.subr.mxu0 0.0
        %604 = vmatpush1.msra.mxu0 %v572
        %605 = vmatprep.subr.mxu0 0.0
        %606 = vmatpush1.msra.mxu0 0.0
        %607 = vmatprep.subr.mxu0 0.0
        %608 = vmatpush1.msra.mxu0 0.0
        %609 = vmatprep.subr.mxu0 0.0
        %610 = vmatpush1.msra.mxu0 0.0
        %611 = vmatprep.subr.mxu0 0.0
        %612 = vmatpush1.msra.mxu0 0.0
        %613 = vmatprep.subr.mxu0 0.0
        %614 = vmatpush1.msra.mxu0 0.0
        %615 = vmatprep.subr.mxu0 0.0
        %616 = vmatpush1.msra.mxu0 0.0
        %617 = vmatprep.subr.mxu0 0.0
        %618 = vmatpush1.msra.mxu0 0.0
        %619 = vmatprep.subr.mxu0 0.0
        %620 = vmatpush1.msra.mxu0 0.0
        %621 = vmatprep.subr.mxu0 0.0
        %622 = vmatpush1.msra.mxu0 0.0
        %623 = vmatprep.subr.mxu0 0.0
        %624 = vmatpush1.msra.mxu0 0.0
        %625 = vmatprep.subr.mxu0 0.0
        %626 = vmatpush1.msra.mxu0 0.0
        %627 = vmatprep.subr.mxu0 0.0
        %628 = vmatpush1.msra.mxu0 0.0
        %629 = vmatprep.subr.mxu0 0.0
        %630 = vmatpush1.msra.mxu0 0.0
        %631 = vmatprep.subr.mxu0 0.0
        %632 = vmatpush1.msra.mxu0 0.0
        %633 = vmatprep.subr.mxu0 0.0
        %634 = vmatpush1.msra.mxu0 0.0
        %635 = vmatprep.subr.mxu0 0.0
        %636 = vmatpush1.msra.mxu0 0.0
        %637 = vmatprep.mubr.f32.mxu0 0.0
        %638 = vmatmul.mubr.f32.gmra.mrb[0].mxu0 %v555
        %v639 = vpop.f32.mrb[0].mxu0
        %v640 = vadd.f32 0.0, %v639
        %v641 = vpop.f32.mrb[0].mxu0
        %642 = vdwg.mxu0
        %v643 = vadd.f32 %v556, %v640
        %644 = vst [vmem:[#allocation2] sm:$0xff] %v643
        %v645 = vld [vmem:[#allocation2] sm:$0xff]
        %v646 = vld [vmem:[%s4] sm:$0x1]
        %v648 = vlaneseq
        %v649 = vshrl.u32 %v648, 7
        %v650 = vsub.s32 0, %v649
        %v651 = vrot.slane %v646, %v650
        %v653 = vadd.f32 %v645, %v651
        %654 = vst [vmem:[%s268] sm:$0xff] %v653
        %s655 = sand.u32 %s141, 1
        %s656 = scalar_lea.sflag [#allocation5], %s655
        %s657 = sand.u32 %s141, 1
        %s658 = smul.addr %s657, 8
        %s659 = scalar_lea.vmem [#allocation9], %s658
        // Predicated region
        $region53: #{tpu_custom_call.1} parent=39 // pred_check
          %p660 = pneg %p151
        $region54: #{tpu_custom_call.1} parent=39 // pred_check_branch
          %662 = sbr.rel (%p660) target = $region56
        $region55: #{tpu_custom_call.1} parent=39 // pred_region
          %s664 = ssub.s32 128, 128
          %665 = vsyncadd %s656, %s664
          %s666 = smul.addr %s23, 128
          %s667 = scalar_lea.hbm %s5, %s666
          %s669 = sshll.u32 %s659, 4
          %s670 = int_to_ptr.vmem [resolvable:$true] %s669
          %672 = dma.vmem_to_hbm [thread:$0]  %s670, 128, %s667, %s656
        $region56: #{tpu_custom_call.1} parent=39 // pred_fallthru
          _
      $region40: #{tpu_custom_call.1} parent=5 // pred_fallthru
        _
      %p673 = scmp.le.s32.totalorder 2, %s18
      // Predicated region
      $region57: #{tpu_custom_call.1} parent=5 // pred_check
        %p674 = pneg %p673
      $region58: #{tpu_custom_call.1} parent=5 // pred_check_branch
        %676 = sbr.rel (%p674) target = $region60
      $region59: #{tpu_custom_call.1} parent=5 // pred_region
        %s677 = ssub.s32 %s18, 2
        // Predicated region
        $region61: #{tpu_custom_call.1} parent=59 // pred_check
          %p678 = pneg %p157
        $region62: #{tpu_custom_call.1} parent=59 // pred_check_branch
          %680 = sbr.rel (%p678) target = $region64
        $region63: #{tpu_custom_call.1} parent=59 // pred_region
          %s681 = sand.u32 %s142, 1
          %s682 = scalar_lea.sflag [#allocation5], %s681
          %s683 = sand.u32 %s142, 1
          %s684 = smul.addr %s683, 8
          %s685 = scalar_lea.vmem [#allocation9], %s684
          %686 = dma.done %s682, 128
        $region64: #{tpu_custom_call.1} parent=59 // pred_fallthru
          _
      $region60: #{tpu_custom_call.1} parent=5 // pred_fallthru
        _
    $region6: #{tpu_custom_call.1} parent=1 // loop_footer
      %s22 = sadd.s32 1, %s18
    $region7: #{tpu_custom_call.1} parent=1 // loop_footer_branch
      %17 = sbr.rel target = $region3
    $region8: #{tpu_custom_call.1} parent=1 // loop_exit
      _
    %687 = vsyncpa [#allocation4], 1
    %s688 = scalar_lea.sflag [#allocation4], 1
    %689 = vsyncpa %s688, 1
    %690 = vsyncpa [#allocation7], 1
    %691 = vsyncpa [#allocation5], 1
    %s692 = scalar_lea.sflag [#allocation5], 1
    %693 = vsyncpa %s692, 1

</llo_original>
